<compile_context>
chip_gen: v5e
topology: v5e:2x2
jax: 0.10.0
libtpu: 0.0.40
codegen_flags: <defaults>
</compile_context>

<pallas_src>
import functools
import numpy as np
import jax
import jax.numpy as jnp
from jax.experimental import pallas as pl
from jax.experimental.pallas import tpu as pltpu

VMEM_SPEC = pl.BlockSpec(memory_space=pltpu.MemorySpace.VMEM)
LN_EPS = 1e-6


def _vmem_limit_bytes():
    # Per-generation scoped-VMEM budget: ~80% of physical VMEM, capped.
    # v5e/v6e: 128 MiB physical -> ~102 MiB; v7x: 64 MiB -> ~51 MiB.
    cap = 64 * 1024 * 1024
    try:
        info = pltpu.get_tpu_info()
        cap = int(getattr(info, 'vmem_capacity_bytes', cap) or cap)
    except Exception:
        pass
    return min(int(cap * 0.8), 110 * 1024 * 1024)


# ---------------------------------------------------------------------------
# small math helpers (used identically inside kernels and in the reference)
# ---------------------------------------------------------------------------
_ERF_P = 0.3275911
_ERF_A = (0.254829592, -0.284496736, 1.421413741, -1.453152027, 1.061405429)


def _erf(x):
    # Abramowitz & Stegun 7.1.26, max abs err ~1.5e-7.  Kept (instead of the
    # tanh approximation) for parity with nn.GELU()'s exact erf.
    s = jnp.where(x >= 0.0, 1.0, -1.0)
    a = jnp.abs(x)
    t = 1.0 / (1.0 + _ERF_P * a)
    poly = t * (_ERF_A[0] + t * (_ERF_A[1] + t * (_ERF_A[2] + t * (_ERF_A[3] + t * _ERF_A[4]))))
    return s * (1.0 - poly * jnp.exp(-a * a))


def _gelu(x):
    return 0.5 * x * (1.0 + _erf(x * (1.0 / np.sqrt(2.0))))


def _softmax(x):
    m = jnp.max(x, axis=-1, keepdims=True)
    e = jnp.exp(x - m)
    return e / jnp.sum(e, axis=-1, keepdims=True)


def _ln(x):
    mu = jnp.mean(x, axis=-1, keepdims=True)
    xc = x - mu
    var = jnp.mean(xc * xc, axis=-1, keepdims=True)
    return xc * jax.lax.rsqrt(var + LN_EPS)


# ---------------------------------------------------------------------------
# Kernel 1: adaLN modulation  out = SiLU(c) @ W + b      (B, D) -> (B, 6D)
# ---------------------------------------------------------------------------
def _adaln_kernel(c_ref, w_ref, b_ref, o_ref):
    h = jax.nn.silu(c_ref[...]).astype(jnp.bfloat16)
    o_ref[...] = jnp.dot(h, w_ref[...], preferred_element_type=jnp.float32) + b_ref[...]


def adaln_modulation(c, w_bf16, b_row):
    B = c.shape[0]
    return pl.pallas_call(
        _adaln_kernel,
        out_shape=jax.ShapeDtypeStruct((B, w_bf16.shape[1]), jnp.float32),
        in_specs=[VMEM_SPEC] * 3,
        out_specs=VMEM_SPEC,
    )(c, w_bf16, b_row)


# ---------------------------------------------------------------------------
# Kernel 2: fused attention branch (per batch element)
#   x2 = x + gate_msa * Attn(modulate(LN(x), shift_msa, scale_msa))
# LN + modulate + QKV projection + batched-head attention + out projection +
# gated residual, all fused.
# ---------------------------------------------------------------------------
def _attn_kernel(num_heads, x_ref, mod_ref, wqkv_ref, bqkv_ref, wo_ref, bo_ref,
                 o_ref, q_s, k_s, v_s, ctx_s):
    x = x_ref[0]                                     # (S, D) f32
    S, D = x.shape
    hd = D // num_heads
    mod = mod_ref[0]                                 # (1, 6D) f32
    shift = mod[:, 0 * D:1 * D]
    scale = mod[:, 1 * D:2 * D]
    gate = mod[:, 2 * D:3 * D]

    # LayerNorm (no affine) + adaLN modulate in f32, then one bf16 cast.
    xm = (_ln(x) * (1.0 + scale) + shift).astype(jnp.bfloat16)        # (S, D)

    # Fused QKV projection (bf16 in, f32 accumulate), cast ONCE to bf16 so no
    # f32 (S, 3D) intermediate stays live.
    qkv = (jnp.dot(xm, wqkv_ref[...], preferred_element_type=jnp.float32)
           + bqkv_ref[...]).astype(jnp.bfloat16)                      # (S, 3D)

    # Layout-only copies into head-major scratches (no MXU work, no concat).
    for h in range(num_heads):
        q_s[h] = qkv[:, 0 * D + h * hd:0 * D + (h + 1) * hd]
        k_s[h] = qkv[:, 1 * D + h * hd:1 * D + (h + 1) * hd]
        v_s[h] = qkv[:, 2 * D + h * hd:2 * D + (h + 1) * hd]

    q = q_s[...]                                     # (H, S, hd) bf16
    k = k_s[...]
    v = v_s[...]

    # Batched-head attention: one dot_general per stage keeps the MXU fed.
    inv_sqrt_hd = 1.0 / float(np.sqrt(hd))
    s = jnp.einsum('hqd,hkd->hqk', q, k,
                   preferred_element_type=jnp.float32) * inv_sqrt_hd  # (H, S, S)
    s = s - jnp.max(s, axis=-1, keepdims=True)
    p = jnp.exp(s)
    p = p * pl.reciprocal(jnp.sum(p, axis=-1, keepdims=True), approx=True)
    ctx = jnp.einsum('hqk,hkd->hqd', p.astype(jnp.bfloat16), v,
                     preferred_element_type=jnp.float32)              # (H, S, hd)

    # Per-head context written to lane offsets of a (S, D) bf16 scratch.
    for h in range(num_heads):
        ctx_s[:, h * hd:(h + 1) * hd] = ctx[h].astype(jnp.bfloat16)

    attn = jnp.dot(ctx_s[...], wo_ref[...],
                   preferred_element_type=jnp.float32) + bo_ref[...]  # (S, D)
    o_ref[0] = x + gate * attn


def attn_block(x, mod3, p, num_heads):
    B, S, D = x.shape
    hd = D // num_heads
    return pl.pallas_call(
        functools.partial(_attn_kernel, num_heads),
        out_shape=jax.ShapeDtypeStruct((B, S, D), jnp.float32),
        grid=(B,),
        in_specs=[
            pl.BlockSpec((1, S, D), lambda b: (b, 0, 0)),
            pl.BlockSpec((1, 1, 6 * D), lambda b: (b, 0, 0)),
            pl.BlockSpec((D, 3 * D), lambda b: (0, 0)),
            pl.BlockSpec((1, 3 * D), lambda b: (0, 0)),
            pl.BlockSpec((D, D), lambda b: (0, 0)),
            pl.BlockSpec((1, D), lambda b: (0, 0)),
        ],
        out_specs=pl.BlockSpec((1, S, D), lambda b: (b, 0, 0)),
        scratch_shapes=[
            pltpu.VMEM((num_heads, S, hd), jnp.bfloat16),   # q (head-major)
            pltpu.VMEM((num_heads, S, hd), jnp.bfloat16),   # k
            pltpu.VMEM((num_heads, S, hd), jnp.bfloat16),   # v
            pltpu.VMEM((S, D), jnp.bfloat16),               # context
        ],
        compiler_params=pltpu.CompilerParams(
            dimension_semantics=("parallel",),
            vmem_limit_bytes=_vmem_limit_bytes()),
    )(x, mod3, p['wqkvT_bf16'], p['bqkv_row'], p['wprojT_bf16'], p['bproj_row'])


# ---------------------------------------------------------------------------
# Kernel 3: fused MoE branch over the merged token axis N = B*S.
#   grid = (token_tiles, E): token axis "parallel", expert axis "arbitrary".
#   Routing weights are computed in the wrapper (jax.lax.top_k) and delivered
#   per expert step as a (TN, 1) column; the output block (resident across the
#   expert axis) is used as the routed-expert accumulator; the shared expert
#   and the gated residual are applied in the e == E-1 epilogue.
# ---------------------------------------------------------------------------
def _moe_kernel(xm_ref, x2_ref, rcol_ref, gtok_ref,
                eg_ref, eu_ref, ed_ref, sg_ref, su_ref, sd_ref, o_ref):
    e = pl.program_id(1)
    n_exp = pl.num_programs(1)

    @pl.when(e == 0)
    def _init():
        o_ref[...] = jnp.zeros_like(o_ref)

    xm = xm_ref[...]                                 # (TN, D) bf16
    g = jnp.dot(xm, eg_ref[0], preferred_element_type=jnp.float32)
    u = jnp.dot(xm, eu_ref[0], preferred_element_type=jnp.float32)
    h = (_gelu(g) * u).astype(jnp.bfloat16)
    y = jnp.dot(h, ed_ref[0], preferred_element_type=jnp.float32)     # (TN, D)
    o_ref[...] = o_ref[...] + y * rcol_ref[0]        # (TN, 1) routing column

    @pl.when(e == n_exp - 1)
    def _epilogue():
        gs = jnp.dot(xm, sg_ref[...], preferred_element_type=jnp.float32)
        us = jnp.dot(xm, su_ref[...], preferred_element_type=jnp.float32)
        hs = (_gelu(gs) * us).astype(jnp.bfloat16)
        shared = jnp.dot(hs, sd_ref[...], preferred_element_type=jnp.float32)
        o_ref[...] = x2_ref[...] + gtok_ref[...] * (o_ref[...] + shared)


def moe_block(xm2_bf16, x2_flat, wdense_e, gate_tok, p, token_tile=None):
    N, D = x2_flat.shape
    E, _, I = p['eg_wT_bf16'].shape
    Is = p['sg_wT_bf16'].shape[1]
    tn = N if token_tile is None else token_tile
    assert N % tn == 0
    T = N // tn
    return pl.pallas_call(
        _moe_kernel,
        out_shape=jax.ShapeDtypeStruct((N, D), jnp.float32),
        grid=(T, E),
        in_specs=[
            pl.BlockSpec((tn, D), lambda t, e: (t, 0)),        # modulated LN(x2), bf16
            pl.BlockSpec((tn, D), lambda t, e: (t, 0)),        # x2 residual, f32
            pl.BlockSpec((1, tn, 1), lambda t, e: (e, t, 0)),  # routing column
            pl.BlockSpec((tn, D), lambda t, e: (t, 0)),        # gate_mlp per token
            pl.BlockSpec((1, D, I), lambda t, e: (e, 0, 0)),   # expert gate proj
            pl.BlockSpec((1, D, I), lambda t, e: (e, 0, 0)),   # expert up proj
            pl.BlockSpec((1, I, D), lambda t, e: (e, 0, 0)),   # expert down proj
            pl.BlockSpec((D, Is), lambda t, e: (0, 0)),        # shared gate proj
            pl.BlockSpec((D, Is), lambda t, e: (0, 0)),        # shared up proj
            pl.BlockSpec((Is, D), lambda t, e: (0, 0)),        # shared down proj
        ],
        out_specs=pl.BlockSpec((tn, D), lambda t, e: (t, 0)),
        compiler_params=pltpu.CompilerParams(
            dimension_semantics=("parallel", "arbitrary"),
            vmem_limit_bytes=_vmem_limit_bytes()),
    )(xm2_bf16, x2_flat, wdense_e, gate_tok,
      p['eg_wT_bf16'], p['eu_wT_bf16'], p['ed_wT_bf16'],
      p['sg_wT_bf16'], p['su_wT_bf16'], p['sd_wT_bf16'])


# ---------------------------------------------------------------------------
# Full DiTBlock forward (eval mode): Pallas kernels + plain-JAX routing glue
# ---------------------------------------------------------------------------
def dit_block_forward(x, c, p, num_heads, top_k):
    B, S, D = x.shape
    N = B * S

    mod = adaln_modulation(c, p['adaln_wT_bf16'], p['adaln_b_row'])    # (B, 6D) f32
    mod3 = mod.reshape(B, 1, 6 * D)

    # attention branch (fused kernel)
    x2 = attn_block(x, mod3, p, num_heads)                             # (B, S, D)

    # MoE routing in plain JAX (matches TC_MoEGate incl. lax.top_k tie-break,
    # norm_topk_prob=False).  xm2 is reused (bf16) as the expert input.
    shift_mlp = mod[:, 3 * D:4 * D]
    scale_mlp = mod[:, 4 * D:5 * D]
    gate_mlp = mod[:, 5 * D:6 * D]
    xm2 = _ln(x2) * (1.0 + scale_mlp[:, None, :]) + shift_mlp[:, None, :]
    xm2_flat = xm2.reshape(N, D)
    scores = _softmax(xm2_flat @ p['gate_wT'])                         # (N, E)
    vals, idx = jax.lax.top_k(scores, top_k)
    wdense = jnp.zeros_like(scores).at[jnp.arange(N)[:, None], idx].set(vals)
    E = scores.shape[-1]
    wdense_e = wdense.T.reshape(E, N, 1)                               # (E, N, 1)

    # gate_mlp expanded per token (small; TODO(synk): pass (B, D) rows and
    # broadcast in-kernel at production scale).
    gate_tok = jnp.broadcast_to(gate_mlp[:, None, :], (B, S, D)).reshape(N, D)

    y = moe_block(xm2_flat.astype(jnp.bfloat16), x2.reshape(N, D),
                  wdense_e, gate_tok, p)
    return y.reshape(B, S, D)


# ---------------------------------------------------------------------------
# pure-JAX reference (f32, independent formulation) for validation
# ---------------------------------------------------------------------------
def _ref_mlp(x, wg_t, wu_t, wd_t):
    return (_gelu(x @ wg_t) * (x @ wu_t)) @ wd_t


def reference_forward(x, c, p, num_heads, top_k):
    B, S, D = x.shape
    N = B * S
    hd = D // num_heads

    mod = jax.nn.silu(c) @ p['adaln_wT'] + p['adaln_b_row']
    sm, scm, gm, sp, scp, gp = (mod[:, i * D:(i + 1) * D] for i in range(6))

    def modulate(v, shift, scale):
        return v * (1.0 + scale[:, None, :]) + shift[:, None, :]

    # attention
    xm1 = modulate(_ln(x), sm, scm)
    qkv = xm1 @ p['wqkvT'] + p['bqkv']
    qkv = qkv.reshape(B, S, 3, num_heads, hd).transpose(2, 0, 3, 1, 4)
    q, k, v = qkv[0], qkv[1], qkv[2]
    a = _softmax(jnp.einsum('bhqd,bhkd->bhqk', q, k) * (hd ** -0.5))
    o = jnp.einsum('bhqk,bhkd->bhqd', a, v).transpose(0, 2, 1, 3).reshape(B, S, D)
    attn_out = o @ p['wprojT'] + p['bproj']
    x2 = x + gm[:, None, :] * attn_out

    # MoE
    xm2 = modulate(_ln(x2), sp, scp)
    xf = xm2.reshape(N, D)
    scores = _softmax(xf @ p['gate_wT'])
    vals, idx = jax.lax.top_k(scores, top_k)
    wdense = jnp.zeros_like(scores).at[jnp.arange(N)[:, None], idx].set(vals)
    eouts = jnp.stack([_ref_mlp(xf, p['eg_wT'][e], p['eu_wT'][e], p['ed_wT'][e])
                       for e in range(p['eg_wT'].shape[0])], axis=1)   # (N, E, D)
    routed = jnp.einsum('ne,ned->nd', wdense, eouts).reshape(B, S, D)
    shared = _ref_mlp(xm2, p['sg_wT'], p['su_wT'], p['sd_wT'])
    return x2 + gp[:, None, :] * (routed + shared)


# ---------------------------------------------------------------------------
# parameter construction (deterministic, synthetic)
# ---------------------------------------------------------------------------
def make_params(key, D, H, E, mlp_ratio, n_shared):
    I = mlp_ratio * D
    Is = n_shared * D
    ks = jax.random.split(key, 13)
    n = lambda k, shp, s=0.05: (s * jax.random.normal(k, shp)).astype(jnp.float32)

    p = dict(
        adaln_wT=n(ks[0], (D, 6 * D)),
        adaln_b_row=n(ks[1], (1, 6 * D), 0.02),
        wqkvT=n(ks[2], (D, 3 * D)),
        bqkv=n(ks[3], (3 * D,), 0.02),
        wprojT=n(ks[4], (D, D)),
        bproj=n(ks[5], (D,), 0.02),
        gate_wT=n(ks[6], (D, E)),
        eg_wT=n(ks[7], (E, D, I)),
        eu_wT=n(ks[8], (E, D, I)),
        ed_wT=n(ks[9], (E, I, D)),
        sg_wT=n(ks[10], (D, Is)),
        su_wT=n(ks[11], (D, Is)),
        sd_wT=n(ks[12], (Is, D)),
    )
    # kernel-side copies: bf16 weights for the MXU, row-shaped biases
    for name in ('adaln_wT', 'wqkvT', 'wprojT', 'eg_wT', 'eu_wT', 'ed_wT',
                 'sg_wT', 'su_wT', 'sd_wT'):
        p[name + '_bf16'] = p[name].astype(jnp.bfloat16)
    p['bqkv_row'] = p['bqkv'].reshape(1, 3 * D)
    p['bproj_row'] = p['bproj'].reshape(1, D)
    return p


if __name__ == "__main__":
    B, S, D, H = 2, 8, 32, 4
    E, TOP_K, MLP_RATIO, N_SHARED = 8, 2, 4, 2

    root = jax.random.PRNGKey(0)
    kx, kc, kp = jax.random.split(root, 3)
    x = jax.random.normal(kx, (B, S, D), dtype=jnp.float32)
    c = jax.random.normal(kc, (B, D), dtype=jnp.float32)
    params = make_params(kp, D, H, E, MLP_RATIO, N_SHARED)

    fwd = jax.jit(dit_block_forward, static_argnames=('num_heads', 'top_k'))
    out = jax.block_until_ready(fwd(x, c, params, num_heads=H, top_k=TOP_K))
    ref = jax.block_until_ready(reference_forward(x, c, params, H, TOP_K))

    assert out.shape == (B, S, D)
    err = float(np.max(np.abs(np.asarray(out) - np.asarray(ref))))
    # bf16 MXU inputs in the kernels vs f32 reference -> tolerance ~1e-2
    assert np.allclose(np.asarray(out), np.asarray(ref), rtol=2e-2, atol=2e-2), (
        f"mismatch vs reference: max abs err {err}")
    print("KERNEL_OK")
</pallas_src>

<mosaic_0001>
module attributes {stable_mosaic.version = 11 : i64} {
  func.func @_adaln_kernel(%arg0: memref<2x32xf32, #tpu.memory_space<vmem>>, %arg1: memref<32x192xbf16, #tpu.memory_space<vmem>>, %arg2: memref<1x192xf32, #tpu.memory_space<vmem>>, %arg3: memref<2x192xf32, #tpu.memory_space<vmem>>) attributes {dimension_semantics = [], scalar_prefetch = 0 : i64, scratch_operands = 0 : i64, tpu.core_type = #tpu.core_type<tc>} {
    %c0 = arith.constant 0 : index
    %c0_0 = arith.constant 0 : index
    %0 = vector.load %arg0[%c0, %c0_0] : memref<2x32xf32, #tpu.memory_space<vmem>>, vector<2x32xf32>
    %1 = arith.negf %0 : vector<2x32xf32>
    %2 = math.exp %1 : vector<2x32xf32>
    %cst = arith.constant 1.000000e+00 : f32
    %3 = vector.broadcast %cst : f32 to vector<2x32xf32>
    %4 = arith.addf %3, %2 : vector<2x32xf32>
    %5 = arith.divf %3, %4 : vector<2x32xf32>
    %6 = arith.mulf %0, %5 : vector<2x32xf32>
    %7 = arith.truncf %6 : vector<2x32xf32> to vector<2x32xbf16>
    %c0_1 = arith.constant 0 : index
    %c0_2 = arith.constant 0 : index
    %8 = vector.load %arg1[%c0_1, %c0_2] : memref<32x192xbf16, #tpu.memory_space<vmem>>, vector<32x192xbf16>
    %cst_3 = arith.constant dense<0.000000e+00> : vector<2x192xf32>
    %9 = tpu.matmul %7, %8, %cst_3 {dimension_numbers = #tpu.dot_dimension_numbers<[1], [0], [0], [1], [0, 0, 1, 1], [], []>} : vector<2x32xbf16>, vector<32x192xbf16>, vector<2x192xf32> -> vector<2x192xf32>
    %c0_4 = arith.constant 0 : index
    %c0_5 = arith.constant 0 : index
    %10 = vector.load %arg2[%c0_4, %c0_5] : memref<1x192xf32, #tpu.memory_space<vmem>>, vector<1x192xf32>
    %11 = vector.broadcast %10 : vector<1x192xf32> to vector<2x192xf32>
    %12 = arith.addf %9, %11 : vector<2x192xf32>
    %c0_6 = arith.constant 0 : index
    %c0_7 = arith.constant 0 : index
    %13 = vector.load %arg3[%c0_6, %c0_7] : memref<2x192xf32, #tpu.memory_space<vmem>>, vector<2x192xf32>
    tpu.vector_store %arg3[%c0_6, %c0_7], %12 {strides = array<i32>} : memref<2x192xf32, #tpu.memory_space<vmem>>, vector<2x192xf32>,
    return
  }
}

module attributes {stable_mosaic.version = 11 : i64} {
  func.func @_attn_kernel(%arg0: i32, %arg1: memref<1x8x32xf32, #tpu.memory_space<vmem>>, %arg2: memref<1x1x192xf32, #tpu.memory_space<vmem>>, %arg3: memref<32x96xbf16, #tpu.memory_space<vmem>>, %arg4: memref<1x96xf32, #tpu.memory_space<vmem>>, %arg5: memref<32x32xbf16, #tpu.memory_space<vmem>>, %arg6: memref<1x32xf32, #tpu.memory_space<vmem>>, %arg7: memref<1x8x32xf32, #tpu.memory_space<vmem>>, %arg8: memref<4x8x8xbf16, #tpu.memory_space<vmem>>, %arg9: memref<4x8x8xbf16, #tpu.memory_space<vmem>>, %arg10: memref<4x8x8xbf16, #tpu.memory_space<vmem>>, %arg11: memref<8x32xbf16, #tpu.memory_space<vmem>>) attributes {dimension_semantics = [#tpu.dimension_semantics<parallel>], iteration_bounds = array<i64: 2>, scalar_prefetch = 0 : i64, scratch_operands = 4 : i64, tpu.core_type = #tpu.core_type<tc>, window_params = [{transform_indices = @transform_0, window_bounds = array<i64: 1, 8, 32>}, {transform_indices = @transform_1, window_bounds = array<i64: 1, 1, 192>}, {pipeline_mode = #tpu.pipeline_mode<synchronous>, transform_indices = @transform_2, window_bounds = array<i64: 32, 96>}, {pipeline_mode = #tpu.pipeline_mode<synchronous>, transform_indices = @transform_3, window_bounds = array<i64: 1, 96>}, {pipeline_mode = #tpu.pipeline_mode<synchronous>, transform_indices = @transform_4, window_bounds = array<i64: 32, 32>}, {pipeline_mode = #tpu.pipeline_mode<synchronous>, transform_indices = @transform_5, window_bounds = array<i64: 1, 32>}, {transform_indices = @transform_6, window_bounds = array<i64: 1, 8, 32>}]} {
    %c0 = arith.constant 0 : index
    %c0_0 = arith.constant 0 : index
    %c0_1 = arith.constant 0 : index
    %0 = vector.load %arg1[%c0, %c0_0, %c0_1] : memref<1x8x32xf32, #tpu.memory_space<vmem>>, vector<1x8x32xf32>
    %1 = vector.shape_cast %0 : vector<1x8x32xf32> to vector<8x32xf32>
    %c0_2 = arith.constant 0 : index
    %c0_3 = arith.constant 0 : index
    %c0_4 = arith.constant 0 : index
    %2 = vector.load %arg2[%c0_2, %c0_3, %c0_4] : memref<1x1x192xf32, #tpu.memory_space<vmem>>, vector<1x1x192xf32>
    %3 = vector.shape_cast %2 : vector<1x1x192xf32> to vector<1x192xf32>
    %4 = vector.extract_strided_slice %3 {offsets = [0, 0], sizes = [1, 32], strides = [1, 1]} : vector<1x192xf32> to vector<1x32xf32>
    %5 = vector.extract_strided_slice %3 {offsets = [0, 32], sizes = [1, 32], strides = [1, 1]} : vector<1x192xf32> to vector<1x32xf32>
    %6 = vector.extract_strided_slice %3 {offsets = [0, 64], sizes = [1, 32], strides = [1, 1]} : vector<1x192xf32> to vector<1x32xf32>
    %cst = arith.constant dense<0.000000e+00> : vector<8xf32>
    %7 = vector.multi_reduction <add>, %1, %cst [1] : vector<8x32xf32> to vector<8xf32>
    %8 = vector.shape_cast %7 : vector<8xf32> to vector<8x1xf32>
    %cst_5 = arith.constant 3.200000e+01 : f32
    %9 = vector.broadcast %cst_5 : f32 to vector<8x1xf32>
    %10 = arith.divf %8, %9 : vector<8x1xf32>
    %11 = vector.broadcast %10 : vector<8x1xf32> to vector<8x32xf32>
    %12 = arith.subf %1, %11 : vector<8x32xf32>
    %13 = arith.mulf %12, %12 : vector<8x32xf32>
    %cst_6 = arith.constant dense<0.000000e+00> : vector<8xf32>
    %14 = vector.multi_reduction <add>, %13, %cst_6 [1] : vector<8x32xf32> to vector<8xf32>
    %15 = vector.shape_cast %14 : vector<8xf32> to vector<8x1xf32>
    %cst_7 = arith.constant 3.200000e+01 : f32
    %16 = vector.broadcast %cst_7 : f32 to vector<8x1xf32>
    %17 = arith.divf %15, %16 : vector<8x1xf32>
    %cst_8 = arith.constant 9.99999997E-7 : f32
    %18 = vector.broadcast %cst_8 : f32 to vector<8x1xf32>
    %19 = arith.addf %17, %18 : vector<8x1xf32>
    %20 = math.rsqrt %19 : vector<8x1xf32>
    %21 = vector.broadcast %20 : vector<8x1xf32> to vector<8x32xf32>
    %22 = arith.mulf %12, %21 : vector<8x32xf32>
    %cst_9 = arith.constant 1.000000e+00 : f32
    %23 = vector.broadcast %cst_9 : f32 to vector<1x32xf32>
    %24 = arith.addf %23, %5 : vector<1x32xf32>
    %25 = vector.broadcast %24 : vector<1x32xf32> to vector<8x32xf32>
    %26 = arith.mulf %22, %25 : vector<8x32xf32>
    %27 = vector.broadcast %4 : vector<1x32xf32> to vector<8x32xf32>
    %28 = arith.addf %26, %27 : vector<8x32xf32>
    %29 = arith.truncf %28 : vector<8x32xf32> to vector<8x32xbf16>
    %c0_10 = arith.constant 0 : index
    %c0_11 = arith.constant 0 : index
    %30 = vector.load %arg3[%c0_10, %c0_11] : memref<32x96xbf16, #tpu.memory_space<vmem>>, vector<32x96xbf16>
    %cst_12 = arith.constant dense<0.000000e+00> : vector<8x96xf32>
    %31 = tpu.matmul %29, %30, %cst_12 {dimension_numbers = #tpu.dot_dimension_numbers<[1], [0], [0], [1], [0, 0, 1, 1], [], []>} : vector<8x32xbf16>, vector<32x96xbf16>, vector<8x96xf32> -> vector<8x96xf32>
    %c0_13 = arith.constant 0 : index
    %c0_14 = arith.constant 0 : index
    %32 = vector.load %arg4[%c0_13, %c0_14] : memref<1x96xf32, #tpu.memory_space<vmem>>, vector<1x96xf32>
    %33 = vector.broadcast %32 : vector<1x96xf32> to vector<8x96xf32>
    %34 = arith.addf %31, %33 : vector<8x96xf32>
    %35 = arith.truncf %34 : vector<8x96xf32> to vector<8x96xbf16>
    %36 = vector.extract_strided_slice %35 {offsets = [0, 0], sizes = [8, 8], strides = [1, 1]} : vector<8x96xbf16> to vector<8x8xbf16>
    %c0_15 = arith.constant 0 : index
    %c0_16 = arith.constant 0 : index
    %c0_17 = arith.constant 0 : index
    %37 = vector.load %arg8[%c0_15, %c0_16, %c0_17] : memref<4x8x8xbf16, #tpu.memory_space<vmem>>, vector<1x8x8xbf16>
    %38 = vector.shape_cast %37 : vector<1x8x8xbf16> to vector<8x8xbf16>
    %39 = vector.shape_cast %36 : vector<8x8xbf16> to vector<1x8x8xbf16>
    tpu.vector_store %arg8[%c0_15, %c0_16, %c0_17], %39 {strides = array<i32>} : memref<4x8x8xbf16, #tpu.memory_space<vmem>>, vector<1x8x8xbf16>,
    %40 = vector.extract_strided_slice %35 {offsets = [0, 32], sizes = [8, 8], strides = [1, 1]} : vector<8x96xbf16> to vector<8x8xbf16>
    %c0_18 = arith.constant 0 : index
    %c0_19 = arith.constant 0 : index
    %c0_20 = arith.constant 0 : index
    %41 = vector.load %arg9[%c0_18, %c0_19, %c0_20] : memref<4x8x8xbf16, #tpu.memory_space<vmem>>, vector<1x8x8xbf16>
    %42 = vector.shape_cast %41 : vector<1x8x8xbf16> to vector<8x8xbf16>
    %43 = vector.shape_cast %40 : vector<8x8xbf16> to vector<1x8x8xbf16>
    tpu.vector_store %arg9[%c0_18, %c0_19, %c0_20], %43 {strides = array<i32>} : memref<4x8x8xbf16, #tpu.memory_space<vmem>>, vector<1x8x8xbf16>,
    %44 = vector.extract_strided_slice %35 {offsets = [0, 64], sizes = [8, 8], strides = [1, 1]} : vector<8x96xbf16> to vector<8x8xbf16>
    %c0_21 = arith.constant 0 : index
    %c0_22 = arith.constant 0 : index
    %c0_23 = arith.constant 0 : index
    %45 = vector.load %arg10[%c0_21, %c0_22, %c0_23] : memref<4x8x8xbf16, #tpu.memory_space<vmem>>, vector<1x8x8xbf16>
    %46 = vector.shape_cast %45 : vector<1x8x8xbf16> to vector<8x8xbf16>
    %47 = vector.shape_cast %44 : vector<8x8xbf16> to vector<1x8x8xbf16>
    tpu.vector_store %arg10[%c0_21, %c0_22, %c0_23], %47 {strides = array<i32>} : memref<4x8x8xbf16, #tpu.memory_space<vmem>>, vector<1x8x8xbf16>,
    %48 = vector.extract_strided_slice %35 {offsets = [0, 8], sizes = [8, 8], strides = [1, 1]} : vector<8x96xbf16> to vector<8x8xbf16>
    %c1 = arith.constant 1 : index
    %c0_24 = arith.constant 0 : index
    %c0_25 = arith.constant 0 : index
    %49 = vector.load %arg8[%c1, %c0_24, %c0_25] : memref<4x8x8xbf16, #tpu.memory_space<vmem>>, vector<1x8x8xbf16>
    %50 = vector.shape_cast %49 : vector<1x8x8xbf16> to vector<8x8xbf16>
    %51 = vector.shape_cast %48 : vector<8x8xbf16> to vector<1x8x8xbf16>
    tpu.vector_store %arg8[%c1, %c0_24, %c0_25], %51 {strides = array<i32>} : memref<4x8x8xbf16, #tpu.memory_space<vmem>>, vector<1x8x8xbf16>,
    %52 = vector.extract_strided_slice %35 {offsets = [0, 40], sizes = [8, 8], strides = [1, 1]} : vector<8x96xbf16> to vector<8x8xbf16>
    %c1_26 = arith.constant 1 : index
    %c0_27 = arith.constant 0 : index
    %c0_28 = arith.constant 0 : index
    %53 = vector.load %arg9[%c1_26, %c0_27, %c0_28] : memref<4x8x8xbf16, #tpu.memory_space<vmem>>, vector<1x8x8xbf16>
    %54 = vector.shape_cast %53 : vector<1x8x8xbf16> to vector<8x8xbf16>
    %55 = vector.shape_cast %52 : vector<8x8xbf16> to vector<1x8x8xbf16>
    tpu.vector_store %arg9[%c1_26, %c0_27, %c0_28], %55 {strides = array<i32>} : memref<4x8x8xbf16, #tpu.memory_space<vmem>>, vector<1x8x8xbf16>,
    %56 = vector.extract_strided_slice %35 {offsets = [0, 72], sizes = [8, 8], strides = [1, 1]} : vector<8x96xbf16> to vector<8x8xbf16>
    %c1_29 = arith.constant 1 : index
    %c0_30 = arith.constant 0 : index
    %c0_31 = arith.constant 0 : index
    %57 = vector.load %arg10[%c1_29, %c0_30, %c0_31] : memref<4x8x8xbf16, #tpu.memory_space<vmem>>, vector<1x8x8xbf16>
    %58 = vector.shape_cast %57 : vector<1x8x8xbf16> to vector<8x8xbf16>
    %59 = vector.shape_cast %56 : vector<8x8xbf16> to vector<1x8x8xbf16>
    tpu.vector_store %arg10[%c1_29, %c0_30, %c0_31], %59 {strides = array<i32>} : memref<4x8x8xbf16, #tpu.memory_space<vmem>>, vector<1x8x8xbf16>,
    %60 = vector.extract_strided_slice %35 {offsets = [0, 16], sizes = [8, 8], strides = [1, 1]} : vector<8x96xbf16> to vector<8x8xbf16>
    %c2 = arith.constant 2 : index
    %c0_32 = arith.constant 0 : index
    %c0_33 = arith.constant 0 : index
    %61 = vector.load %arg8[%c2, %c0_32, %c0_33] : memref<4x8x8xbf16, #tpu.memory_space<vmem>>, vector<1x8x8xbf16>
    %62 = vector.shape_cast %61 : vector<1x8x8xbf16> to vector<8x8xbf16>
    %63 = vector.shape_cast %60 : vector<8x8xbf16> to vector<1x8x8xbf16>
    tpu.vector_store %arg8[%c2, %c0_32, %c0_33], %63 {strides = array<i32>} : memref<4x8x8xbf16, #tpu.memory_space<vmem>>, vector<1x8x8xbf16>,
    %64 = vector.extract_strided_slice %35 {offsets = [0, 48], sizes = [8, 8], strides = [1, 1]} : vector<8x96xbf16> to vector<8x8xbf16>
    %c2_34 = arith.constant 2 : index
    %c0_35 = arith.constant 0 : index
    %c0_36 = arith.constant 0 : index
    %65 = vector.load %arg9[%c2_34, %c0_35, %c0_36] : memref<4x8x8xbf16, #tpu.memory_space<vmem>>, vector<1x8x8xbf16>
    %66 = vector.shape_cast %65 : vector<1x8x8xbf16> to vector<8x8xbf16>
    %67 = vector.shape_cast %64 : vector<8x8xbf16> to vector<1x8x8xbf16>
    tpu.vector_store %arg9[%c2_34, %c0_35, %c0_36], %67 {strides = array<i32>} : memref<4x8x8xbf16, #tpu.memory_space<vmem>>, vector<1x8x8xbf16>,
    %68 = vector.extract_strided_slice %35 {offsets = [0, 80], sizes = [8, 8], strides = [1, 1]} : vector<8x96xbf16> to vector<8x8xbf16>
    %c2_37 = arith.constant 2 : index
    %c0_38 = arith.constant 0 : index
    %c0_39 = arith.constant 0 : index
    %69 = vector.load %arg10[%c2_37, %c0_38, %c0_39] : memref<4x8x8xbf16, #tpu.memory_space<vmem>>, vector<1x8x8xbf16>
    %70 = vector.shape_cast %69 : vector<1x8x8xbf16> to vector<8x8xbf16>
    %71 = vector.shape_cast %68 : vector<8x8xbf16> to vector<1x8x8xbf16>
    tpu.vector_store %arg10[%c2_37, %c0_38, %c0_39], %71 {strides = array<i32>} : memref<4x8x8xbf16, #tpu.memory_space<vmem>>, vector<1x8x8xbf16>,
    %72 = vector.extract_strided_slice %35 {offsets = [0, 24], sizes = [8, 8], strides = [1, 1]} : vector<8x96xbf16> to vector<8x8xbf16>
    %c3 = arith.constant 3 : index
    %c0_40 = arith.constant 0 : index
    %c0_41 = arith.constant 0 : index
    %73 = vector.load %arg8[%c3, %c0_40, %c0_41] : memref<4x8x8xbf16, #tpu.memory_space<vmem>>, vector<1x8x8xbf16>
    %74 = vector.shape_cast %73 : vector<1x8x8xbf16> to vector<8x8xbf16>
    %75 = vector.shape_cast %72 : vector<8x8xbf16> to vector<1x8x8xbf16>
    tpu.vector_store %arg8[%c3, %c0_40, %c0_41], %75 {strides = array<i32>} : memref<4x8x8xbf16, #tpu.memory_space<vmem>>, vector<1x8x8xbf16>,
    %76 = vector.extract_strided_slice %35 {offsets = [0, 56], sizes = [8, 8], strides = [1, 1]} : vector<8x96xbf16> to vector<8x8xbf16>
    %c3_42 = arith.constant 3 : index
    %c0_43 = arith.constant 0 : index
    %c0_44 = arith.constant 0 : index
    %77 = vector.load %arg9[%c3_42, %c0_43, %c0_44] : memref<4x8x8xbf16, #tpu.memory_space<vmem>>, vector<1x8x8xbf16>
    %78 = vector.shape_cast %77 : vector<1x8x8xbf16> to vector<8x8xbf16>
    %79 = vector.shape_cast %76 : vector<8x8xbf16> to vector<1x8x8xbf16>
    tpu.vector_store %arg9[%c3_42, %c0_43, %c0_44], %79 {strides = array<i32>} : memref<4x8x8xbf16, #tpu.memory_space<vmem>>, vector<1x8x8xbf16>,
    %80 = vector.extract_strided_slice %35 {offsets = [0, 88], sizes = [8, 8], strides = [1, 1]} : vector<8x96xbf16> to vector<8x8xbf16>
    %c3_45 = arith.constant 3 : index
    %c0_46 = arith.constant 0 : index
    %c0_47 = arith.constant 0 : index
    %81 = vector.load %arg10[%c3_45, %c0_46, %c0_47] : memref<4x8x8xbf16, #tpu.memory_space<vmem>>, vector<1x8x8xbf16>
    %82 = vector.shape_cast %81 : vector<1x8x8xbf16> to vector<8x8xbf16>
    %83 = vector.shape_cast %80 : vector<8x8xbf16> to vector<1x8x8xbf16>
    tpu.vector_store %arg10[%c3_45, %c0_46, %c0_47], %83 {strides = array<i32>} : memref<4x8x8xbf16, #tpu.memory_space<vmem>>, vector<1x8x8xbf16>,
    %c0_48 = arith.constant 0 : index
    %c0_49 = arith.constant 0 : index
    %c0_50 = arith.constant 0 : index
    %84 = vector.load %arg8[%c0_48, %c0_49, %c0_50] : memref<4x8x8xbf16, #tpu.memory_space<vmem>>, vector<4x8x8xbf16>
    %c0_51 = arith.constant 0 : index
    %c0_52 = arith.constant 0 : index
    %c0_53 = arith.constant 0 : index
    %85 = vector.load %arg9[%c0_51, %c0_52, %c0_53] : memref<4x8x8xbf16, #tpu.memory_space<vmem>>, vector<4x8x8xbf16>
    %c0_54 = arith.constant 0 : index
    %c0_55 = arith.constant 0 : index
    %c0_56 = arith.constant 0 : index
    %86 = vector.load %arg10[%c0_54, %c0_55, %c0_56] : memref<4x8x8xbf16, #tpu.memory_space<vmem>>, vector<4x8x8xbf16>
    "tpu.trace_start"() <{level = 10 : i32, message = "hqd,hkd->hqk"}> : () -> ()
    %cst_57 = arith.constant dense<0.000000e+00> : vector<4x8x8xf32>
    %87 = tpu.matmul %84, %85, %cst_57 {dimension_numbers = #tpu.dot_dimension_numbers<[2], [2], [1], [1], [0, 0, 0, 1, 1, 1], [0], [0]>} : vector<4x8x8xbf16>, vector<4x8x8xbf16>, vector<4x8x8xf32> -> vector<4x8x8xf32>
    "tpu.trace_stop"() : () -> ()
    %cst_58 = arith.constant 0.353553385 : f32
    %88 = vector.broadcast %cst_58 : f32 to vector<4x8x8xf32>
    %89 = arith.mulf %87, %88 : vector<4x8x8xf32>
    %cst_59 = arith.constant dense<0xFF800000> : vector<4x8xf32>
    %90 = vector.multi_reduction <maximumf>, %89, %cst_59 [2] : vector<4x8x8xf32> to vector<4x8xf32>
    %91 = vector.shape_cast %90 : vector<4x8xf32> to vector<4x8x1xf32>
    %92 = vector.broadcast %91 : vector<4x8x1xf32> to vector<4x8x8xf32>
    %93 = arith.subf %89, %92 : vector<4x8x8xf32>
    %94 = math.exp %93 : vector<4x8x8xf32>
    %cst_60 = arith.constant dense<0.000000e+00> : vector<4x8xf32>
    %95 = vector.multi_reduction <add>, %94, %cst_60 [2] : vector<4x8x8xf32> to vector<4x8xf32>
    %96 = vector.shape_cast %95 : vector<4x8xf32> to vector<4x8x1xf32>
    %97 = tpu.reciprocal %96 {approx = true} : vector<4x8x1xf32> -> vector<4x8x1xf32>
    %98 = vector.broadcast %97 : vector<4x8x1xf32> to vector<4x8x8xf32>
    %99 = arith.mulf %94, %98 : vector<4x8x8xf32>
    %100 = arith.truncf %99 : vector<4x8x8xf32> to vector<4x8x8xbf16>
    "tpu.trace_start"() <{level = 10 : i32, message = "hqk,hkd->hqd"}> : () -> ()
    %cst_61 = arith.constant dense<0.000000e+00> : vector<4x8x8xf32>
    %101 = tpu.matmul %100, %86, %cst_61 {dimension_numbers = #tpu.dot_dimension_numbers<[2], [1], [1], [2], [0, 0, 0, 1, 1, 2], [0], [0]>} : vector<4x8x8xbf16>, vector<4x8x8xbf16>, vector<4x8x8xf32> -> vector<4x8x8xf32>
    "tpu.trace_stop"() : () -> ()
    %102 = vector.extract_strided_slice %101 {offsets = [0, 0, 0], sizes = [1, 8, 8], strides = [1, 1, 1]} : vector<4x8x8xf32> to vector<1x8x8xf32>
    %103 = vector.shape_cast %102 : vector<1x8x8xf32> to vector<8x8xf32>
    %104 = arith.truncf %103 : vector<8x8xf32> to vector<8x8xbf16>
    %c0_62 = arith.constant 0 : index
    %c0_63 = arith.constant 0 : index
    %105 = vector.load %arg11[%c0_62, %c0_63] : memref<8x32xbf16, #tpu.memory_space<vmem>>, vector<8x8xbf16>
    tpu.vector_store %arg11[%c0_62, %c0_63], %104 {strides = array<i32>} : memref<8x32xbf16, #tpu.memory_space<vmem>>, vector<8x8xbf16>,
    %106 = vector.extract_strided_slice %101 {offsets = [1, 0, 0], sizes = [1, 8, 8], strides = [1, 1, 1]} : vector<4x8x8xf32> to vector<1x8x8xf32>
    %107 = vector.shape_cast %106 : vector<1x8x8xf32> to vector<8x8xf32>
    %108 = arith.truncf %107 : vector<8x8xf32> to vector<8x8xbf16>
    %c0_64 = arith.constant 0 : index
    %c8 = arith.constant 8 : index
    %109 = vector.load %arg11[%c0_64, %c8] : memref<8x32xbf16, #tpu.memory_space<vmem>>, vector<8x8xbf16>
    tpu.vector_store %arg11[%c0_64, %c8], %108 {strides = array<i32>} : memref<8x32xbf16, #tpu.memory_space<vmem>>, vector<8x8xbf16>,
    %110 = vector.extract_strided_slice %101 {offsets = [2, 0, 0], sizes = [1, 8, 8], strides = [1, 1, 1]} : vector<4x8x8xf32> to vector<1x8x8xf32>
    %111 = vector.shape_cast %110 : vector<1x8x8xf32> to vector<8x8xf32>
    %112 = arith.truncf %111 : vector<8x8xf32> to vector<8x8xbf16>
    %c0_65 = arith.constant 0 : index
    %c16 = arith.constant 16 : index
    %113 = vector.load %arg11[%c0_65, %c16] : memref<8x32xbf16, #tpu.memory_space<vmem>>, vector<8x8xbf16>
    tpu.vector_store %arg11[%c0_65, %c16], %112 {strides = array<i32>} : memref<8x32xbf16, #tpu.memory_space<vmem>>, vector<8x8xbf16>,
    %114 = vector.extract_strided_slice %101 {offsets = [3, 0, 0], sizes = [1, 8, 8], strides = [1, 1, 1]} : vector<4x8x8xf32> to vector<1x8x8xf32>
    %115 = vector.shape_cast %114 : vector<1x8x8xf32> to vector<8x8xf32>
    %116 = arith.truncf %115 : vector<8x8xf32> to vector<8x8xbf16>
    %c0_66 = arith.constant 0 : index
    %c24 = arith.constant 24 : index
    %117 = vector.load %arg11[%c0_66, %c24] : memref<8x32xbf16, #tpu.memory_space<vmem>>, vector<8x8xbf16>
    tpu.vector_store %arg11[%c0_66, %c24], %116 {strides = array<i32>} : memref<8x32xbf16, #tpu.memory_space<vmem>>, vector<8x8xbf16>,
    %c0_67 = arith.constant 0 : index
    %c0_68 = arith.constant 0 : index
    %118 = vector.load %arg11[%c0_67, %c0_68] : memref<8x32xbf16, #tpu.memory_space<vmem>>, vector<8x32xbf16>
    %c0_69 = arith.constant 0 : index
    %c0_70 = arith.constant 0 : index
    %119 = vector.load %arg5[%c0_69, %c0_70] : memref<32x32xbf16, #tpu.memory_space<vmem>>, vector<32x32xbf16>
    %cst_71 = arith.constant dense<0.000000e+00> : vector<8x32xf32>
    %120 = tpu.matmul %118, %119, %cst_71 {dimension_numbers = #tpu.dot_dimension_numbers<[1], [0], [0], [1], [0, 0, 1, 1], [], []>} : vector<8x32xbf16>, vector<32x32xbf16>, vector<8x32xf32> -> vector<8x32xf32>
    %c0_72 = arith.constant 0 : index
    %c0_73 = arith.constant 0 : index
    %121 = vector.load %arg6[%c0_72, %c0_73] : memref<1x32xf32, #tpu.memory_space<vmem>>, vector<1x32xf32>
    %122 = vector.broadcast %121 : vector<1x32xf32> to vector<8x32xf32>
    %123 = arith.addf %120, %122 : vector<8x32xf32>
    %124 = vector.broadcast %6 : vector<1x32xf32> to vector<8x32xf32>
    %125 = arith.mulf %124, %123 : vector<8x32xf32>
    %126 = arith.addf %1, %125 : vector<8x32xf32>
    %c0_74 = arith.constant 0 : index
    %c0_75 = arith.constant 0 : index
    %c0_76 = arith.constant 0 : index
    %127 = vector.load %arg7[%c0_74, %c0_75, %c0_76] : memref<1x8x32xf32, #tpu.memory_space<vmem>>, vector<1x8x32xf32>
    %128 = vector.shape_cast %127 : vector<1x8x32xf32> to vector<8x32xf32>
    %129 = vector.shape_cast %126 : vector<8x32xf32> to vector<1x8x32xf32>
    tpu.vector_store %arg7[%c0_74, %c0_75, %c0_76], %129 {strides = array<i32>} : memref<1x8x32xf32, #tpu.memory_space<vmem>>, vector<1x8x32xf32>,
    return
  }
  func.func @transform_0(%arg0: i32) -> (i32, i32, i32) {
    %c0_i32 = arith.constant 0 : i32
    %c0_i32_0 = arith.constant 0 : i32
    %c0_i32_1 = arith.constant 0 : i32
    return %arg0, %c0_i32, %c0_i32_0 : i32, i32, i32
  }
  func.func @transform_1(%arg0: i32) -> (i32, i32, i32) {
    %c0_i32 = arith.constant 0 : i32
    %c0_i32_0 = arith.constant 0 : i32
    %c0_i32_1 = arith.constant 0 : i32
    return %arg0, %c0_i32, %c0_i32_0 : i32, i32, i32
  }
  func.func @transform_2(%arg0: i32) -> (i32, i32) {
    %c0_i32 = arith.constant 0 : i32
    %c0_i32_0 = arith.constant 0 : i32
    %c0_i32_1 = arith.constant 0 : i32
    return %c0_i32, %c0_i32_0 : i32, i32
  }
  func.func @transform_3(%arg0: i32) -> (i32, i32) {
    %c0_i32 = arith.constant 0 : i32
    %c0_i32_0 = arith.constant 0 : i32
    %c0_i32_1 = arith.constant 0 : i32
    return %c0_i32, %c0_i32_0 : i32, i32
  }
  func.func @transform_4(%arg0: i32) -> (i32, i32) {
    %c0_i32 = arith.constant 0 : i32
    %c0_i32_0 = arith.constant 0 : i32
    %c0_i32_1 = arith.constant 0 : i32
    return %c0_i32, %c0_i32_0 : i32, i32
  }
  func.func @transform_5(%arg0: i32) -> (i32, i32) {
    %c0_i32 = arith.constant 0 : i32
    %c0_i32_0 = arith.constant 0 : i32
    %c0_i32_1 = arith.constant 0 : i32
    return %c0_i32, %c0_i32_0 : i32, i32
  }
  func.func @transform_6(%arg0: i32) -> (i32, i32, i32) {
    %c0_i32 = arith.constant 0 : i32
    %c0_i32_0 = arith.constant 0 : i32
    %c0_i32_1 = arith.constant 0 : i32
    return %arg0, %c0_i32, %c0_i32_0 : i32, i32, i32
  }
}

module attributes {stable_mosaic.version = 11 : i64} {
  func.func @_moe_kernel(%arg0: i32, %arg1: i32, %arg2: memref<16x32xbf16, #tpu.memory_space<vmem>>, %arg3: memref<16x32xf32, #tpu.memory_space<vmem>>, %arg4: memref<1x16x1xf32, #tpu.memory_space<vmem>>, %arg5: memref<16x32xf32, #tpu.memory_space<vmem>>, %arg6: memref<1x32x128xbf16, #tpu.memory_space<vmem>>, %arg7: memref<1x32x128xbf16, #tpu.memory_space<vmem>>, %arg8: memref<1x128x32xbf16, #tpu.memory_space<vmem>>, %arg9: memref<32x64xbf16, #tpu.memory_space<vmem>>, %arg10: memref<32x64xbf16, #tpu.memory_space<vmem>>, %arg11: memref<64x32xbf16, #tpu.memory_space<vmem>>, %arg12: memref<16x32xf32, #tpu.memory_space<vmem>>) attributes {dimension_semantics = [#tpu.dimension_semantics<parallel>, #tpu.dimension_semantics<arbitrary>], iteration_bounds = array<i64: 1, 8>, scalar_prefetch = 0 : i64, scratch_operands = 0 : i64, tpu.core_type = #tpu.core_type<tc>, window_params = [{transform_indices = @transform_0, window_bounds = array<i64: 16, 32>}, {transform_indices = @transform_1, window_bounds = array<i64: 16, 32>}, {transform_indices = @transform_2, window_bounds = array<i64: 1, 16, 1>}, {transform_indices = @transform_3, window_bounds = array<i64: 16, 32>}, {transform_indices = @transform_4, window_bounds = array<i64: 1, 32, 128>}, {transform_indices = @transform_5, window_bounds = array<i64: 1, 32, 128>}, {transform_indices = @transform_6, window_bounds = array<i64: 1, 128, 32>}, {pipeline_mode = #tpu.pipeline_mode<synchronous>, transform_indices = @transform_7, window_bounds = array<i64: 32, 64>}, {pipeline_mode = #tpu.pipeline_mode<synchronous>, transform_indices = @transform_8, window_bounds = array<i64: 32, 64>}, {pipeline_mode = #tpu.pipeline_mode<synchronous>, transform_indices = @transform_9, window_bounds = array<i64: 64, 32>}, {transform_indices = @transform_10, window_bounds = array<i64: 16, 32>}]} {
    %c0_i32 = arith.constant 0 : i32
    %0 = arith.cmpi eq, %arg1, %c0_i32 : i32
    %1 = arith.extui %0 : i1 to i32
    %c0_i32_0 = arith.constant 0 : i32
    %2 = arith.cmpi ne, %1, %c0_i32_0 : i32
    scf.if %2 {
      %cst_37 = arith.constant 0.000000e+00 : f32
      %66 = vector.broadcast %cst_37 : f32 to vector<16x32xf32>
      %c0_38 = arith.constant 0 : index
      %c0_39 = arith.constant 0 : index
      %67 = vector.load %arg12[%c0_38, %c0_39] : memref<16x32xf32, #tpu.memory_space<vmem>>, vector<16x32xf32>
      tpu.vector_store %arg12[%c0_38, %c0_39], %66 {strides = array<i32>} : memref<16x32xf32, #tpu.memory_space<vmem>>, vector<16x32xf32>,
    } else {
    }
    %c0 = arith.constant 0 : index
    %c0_1 = arith.constant 0 : index
    %3 = vector.load %arg2[%c0, %c0_1] : memref<16x32xbf16, #tpu.memory_space<vmem>>, vector<16x32xbf16>
    %c0_2 = arith.constant 0 : index
    %c0_3 = arith.constant 0 : index
    %c0_4 = arith.constant 0 : index
    %4 = vector.load %arg6[%c0_2, %c0_3, %c0_4] : memref<1x32x128xbf16, #tpu.memory_space<vmem>>, vector<1x32x128xbf16>
    %5 = vector.shape_cast %4 : vector<1x32x128xbf16> to vector<32x128xbf16>
    %cst = arith.constant dense<0.000000e+00> : vector<16x128xf32>
    %6 = tpu.matmul %3, %5, %cst {dimension_numbers = #tpu.dot_dimension_numbers<[1], [0], [0], [1], [0, 0, 1, 1], [], []>} : vector<16x32xbf16>, vector<32x128xbf16>, vector<16x128xf32> -> vector<16x128xf32>
    %c0_5 = arith.constant 0 : index
    %c0_6 = arith.constant 0 : index
    %c0_7 = arith.constant 0 : index
    %7 = vector.load %arg7[%c0_5, %c0_6, %c0_7] : memref<1x32x128xbf16, #tpu.memory_space<vmem>>, vector<1x32x128xbf16>
    %8 = vector.shape_cast %7 : vector<1x32x128xbf16> to vector<32x128xbf16>
    %cst_8 = arith.constant dense<0.000000e+00> : vector<16x128xf32>
    %9 = tpu.matmul %3, %8, %cst_8 {dimension_numbers = #tpu.dot_dimension_numbers<[1], [0], [0], [1], [0, 0, 1, 1], [], []>} : vector<16x32xbf16>, vector<32x128xbf16>, vector<16x128xf32> -> vector<16x128xf32>
    %cst_9 = arith.constant 5.000000e-01 : f32
    %10 = vector.broadcast %cst_9 : f32 to vector<16x128xf32>
    %11 = arith.mulf %10, %6 : vector<16x128xf32>
    %cst_10 = arith.constant 0.707106769 : f32
    %12 = vector.broadcast %cst_10 : f32 to vector<16x128xf32>
    %13 = arith.mulf %6, %12 : vector<16x128xf32>
    %cst_11 = arith.constant 0.000000e+00 : f32
    %14 = vector.broadcast %cst_11 : f32 to vector<16x128xf32>
    %15 = arith.cmpf oge, %13, %14 : vector<16x128xf32>
    %cst_12 = arith.constant 1.000000e+00 : f32
    %cst_13 = arith.constant -1.000000e+00 : f32
    %16 = vector.broadcast %cst_12 : f32 to vector<16x128xf32>
    %17 = vector.broadcast %cst_13 : f32 to vector<16x128xf32>
    %18 = arith.select %15, %16, %17 : vector<16x128xi1>, vector<16x128xf32>
    %19 = math.absf %13 : vector<16x128xf32>
    %cst_14 = arith.constant 0.327591091 : f32
    %20 = vector.broadcast %cst_14 : f32 to vector<16x128xf32>
    %21 = arith.mulf %20, %19 : vector<16x128xf32>
    %cst_15 = arith.constant 1.000000e+00 : f32
    %22 = vector.broadcast %cst_15 : f32 to vector<16x128xf32>
    %23 = arith.addf %22, %21 : vector<16x128xf32>
    %cst_16 = arith.constant 1.000000e+00 : f32
    %24 = vector.broadcast %cst_16 : f32 to vector<16x128xf32>
    %25 = arith.divf %24, %23 : vector<16x128xf32>
    %cst_17 = arith.constant 1.06140542 : f32
    %26 = vector.broadcast %cst_17 : f32 to vector<16x128xf32>
    %27 = arith.mulf %25, %26 : vector<16x128xf32>
    %cst_18 = arith.constant -1.45315206 : f32
    %28 = vector.broadcast %cst_18 : f32 to vector<16x128xf32>
    %29 = arith.addf %28, %27 : vector<16x128xf32>
    %30 = arith.mulf %25, %29 : vector<16x128xf32>
    %cst_19 = arith.constant 1.42141378 : f32
    %31 = vector.broadcast %cst_19 : f32 to vector<16x128xf32>
    %32 = arith.addf %31, %30 : vector<16x128xf32>
    %33 = arith.mulf %25, %32 : vector<16x128xf32>
    %cst_20 = arith.constant -0.284496725 : f32
    %34 = vector.broadcast %cst_20 : f32 to vector<16x128xf32>
    %35 = arith.addf %34, %33 : vector<16x128xf32>
    %36 = arith.mulf %25, %35 : vector<16x128xf32>
    %cst_21 = arith.constant 0.254829586 : f32
    %37 = vector.broadcast %cst_21 : f32 to vector<16x128xf32>
    %38 = arith.addf %37, %36 : vector<16x128xf32>
    %39 = arith.mulf %25, %38 : vector<16x128xf32>
    %cst_22 = arith.constant 0.000000e+00 : f32
    %40 = vector.broadcast %cst_22 : f32 to vector<16x128xf32>
    %41 = arith.subf %40, %19 : vector<16x128xf32>
    %42 = arith.mulf %41, %19 : vector<16x128xf32>
    %43 = math.exp %42 : vector<16x128xf32>
    %44 = arith.mulf %39, %43 : vector<16x128xf32>
    %cst_23 = arith.constant 1.000000e+00 : f32
    %45 = vector.broadcast %cst_23 : f32 to vector<16x128xf32>
    %46 = arith.subf %45, %44 : vector<16x128xf32>
    %47 = arith.mulf %18, %46 : vector<16x128xf32>
    %cst_24 = arith.constant 1.000000e+00 : f32
    %48 = vector.broadcast %cst_24 : f32 to vector<16x128xf32>
    %49 = arith.addf %48, %47 : vector<16x128xf32>
    %50 = arith.mulf %11, %49 : vector<16x128xf32>
    %51 = arith.mulf %50, %9 : vector<16x128xf32>
    %52 = arith.truncf %51 : vector<16x128xf32> to vector<16x128xbf16>
    %c0_25 = arith.constant 0 : index
    %c0_26 = arith.constant 0 : index
    %c0_27 = arith.constant 0 : index
    %53 = vector.load %arg8[%c0_25, %c0_26, %c0_27] : memref<1x128x32xbf16, #tpu.memory_space<vmem>>, vector<1x128x32xbf16>
    %54 = vector.shape_cast %53 : vector<1x128x32xbf16> to vector<128x32xbf16>
    %cst_28 = arith.constant dense<0.000000e+00> : vector<16x32xf32>
    %55 = tpu.matmul %52, %54, %cst_28 {dimension_numbers = #tpu.dot_dimension_numbers<[1], [0], [0], [1], [0, 0, 1, 1], [], []>} : vector<16x128xbf16>, vector<128x32xbf16>, vector<16x32xf32> -> vector<16x32xf32>
    %c0_29 = arith.constant 0 : index
    %c0_30 = arith.constant 0 : index
    %56 = vector.load %arg12[%c0_29, %c0_30] : memref<16x32xf32, #tpu.memory_space<vmem>>, vector<16x32xf32>
    %c0_31 = arith.constant 0 : index
    %c0_32 = arith.constant 0 : index
    %c0_33 = arith.constant 0 : index
    %57 = vector.load %arg4[%c0_31, %c0_32, %c0_33] : memref<1x16x1xf32, #tpu.memory_space<vmem>>, vector<1x16x1xf32>
    %58 = vector.shape_cast %57 : vector<1x16x1xf32> to vector<16x1xf32>
    %59 = vector.broadcast %58 : vector<16x1xf32> to vector<16x32xf32>
    %60 = arith.mulf %55, %59 : vector<16x32xf32>
    %61 = arith.addf %56, %60 : vector<16x32xf32>
    %c0_34 = arith.constant 0 : index
    %c0_35 = arith.constant 0 : index
    %62 = vector.load %arg12[%c0_34, %c0_35] : memref<16x32xf32, #tpu.memory_space<vmem>>, vector<16x32xf32>
    tpu.vector_store %arg12[%c0_34, %c0_35], %61 {strides = array<i32>} : memref<16x32xf32, #tpu.memory_space<vmem>>, vector<16x32xf32>,
    %c7_i32 = arith.constant 7 : i32
    %63 = arith.cmpi eq, %arg1, %c7_i32 : i32
    %64 = arith.extui %63 : i1 to i32
    %c0_i32_36 = arith.constant 0 : i32
    %65 = arith.cmpi ne, %64, %c0_i32_36 : i32
    scf.if %65 {
      %c0_37 = arith.constant 0 : index
      %c0_38 = arith.constant 0 : index
      %66 = vector.load %arg9[%c0_37, %c0_38] : memref<32x64xbf16, #tpu.memory_space<vmem>>, vector<32x64xbf16>
      %cst_39 = arith.constant dense<0.000000e+00> : vector<16x64xf32>
      %67 = tpu.matmul %3, %66, %cst_39 {dimension_numbers = #tpu.dot_dimension_numbers<[1], [0], [0], [1], [0, 0, 1, 1], [], []>} : vector<16x32xbf16>, vector<32x64xbf16>, vector<16x64xf32> -> vector<16x64xf32>
      %c0_40 = arith.constant 0 : index
      %c0_41 = arith.constant 0 : index
      %68 = vector.load %arg10[%c0_40, %c0_41] : memref<32x64xbf16, #tpu.memory_space<vmem>>, vector<32x64xbf16>
      %cst_42 = arith.constant dense<0.000000e+00> : vector<16x64xf32>
      %69 = tpu.matmul %3, %68, %cst_42 {dimension_numbers = #tpu.dot_dimension_numbers<[1], [0], [0], [1], [0, 0, 1, 1], [], []>} : vector<16x32xbf16>, vector<32x64xbf16>, vector<16x64xf32> -> vector<16x64xf32>
      %cst_43 = arith.constant 5.000000e-01 : f32
      %70 = vector.broadcast %cst_43 : f32 to vector<16x64xf32>
      %71 = arith.mulf %70, %67 : vector<16x64xf32>
      %cst_44 = arith.constant 0.707106769 : f32
      %72 = vector.broadcast %cst_44 : f32 to vector<16x64xf32>
      %73 = arith.mulf %67, %72 : vector<16x64xf32>
      %cst_45 = arith.constant 0.000000e+00 : f32
      %74 = vector.broadcast %cst_45 : f32 to vector<16x64xf32>
      %75 = arith.cmpf oge, %73, %74 : vector<16x64xf32>
      %cst_46 = arith.constant 1.000000e+00 : f32
      %cst_47 = arith.constant -1.000000e+00 : f32
      %76 = vector.broadcast %cst_46 : f32 to vector<16x64xf32>
      %77 = vector.broadcast %cst_47 : f32 to vector<16x64xf32>
      %78 = arith.select %75, %76, %77 : vector<16x64xi1>, vector<16x64xf32>
      %79 = math.absf %73 : vector<16x64xf32>
      %cst_48 = arith.constant 0.327591091 : f32
      %80 = vector.broadcast %cst_48 : f32 to vector<16x64xf32>
      %81 = arith.mulf %80, %79 : vector<16x64xf32>
      %cst_49 = arith.constant 1.000000e+00 : f32
      %82 = vector.broadcast %cst_49 : f32 to vector<16x64xf32>
      %83 = arith.addf %82, %81 : vector<16x64xf32>
      %cst_50 = arith.constant 1.000000e+00 : f32
      %84 = vector.broadcast %cst_50 : f32 to vector<16x64xf32>
      %85 = arith.divf %84, %83 : vector<16x64xf32>
      %cst_51 = arith.constant 1.06140542 : f32
      %86 = vector.broadcast %cst_51 : f32 to vector<16x64xf32>
      %87 = arith.mulf %85, %86 : vector<16x64xf32>
      %cst_52 = arith.constant -1.45315206 : f32
      %88 = vector.broadcast %cst_52 : f32 to vector<16x64xf32>
      %89 = arith.addf %88, %87 : vector<16x64xf32>
      %90 = arith.mulf %85, %89 : vector<16x64xf32>
      %cst_53 = arith.constant 1.42141378 : f32
      %91 = vector.broadcast %cst_53 : f32 to vector<16x64xf32>
      %92 = arith.addf %91, %90 : vector<16x64xf32>
      %93 = arith.mulf %85, %92 : vector<16x64xf32>
      %cst_54 = arith.constant -0.284496725 : f32
      %94 = vector.broadcast %cst_54 : f32 to vector<16x64xf32>
      %95 = arith.addf %94, %93 : vector<16x64xf32>
      %96 = arith.mulf %85, %95 : vector<16x64xf32>
      %cst_55 = arith.constant 0.254829586 : f32
      %97 = vector.broadcast %cst_55 : f32 to vector<16x64xf32>
      %98 = arith.addf %97, %96 : vector<16x64xf32>
      %99 = arith.mulf %85, %98 : vector<16x64xf32>
      %cst_56 = arith.constant 0.000000e+00 : f32
      %100 = vector.broadcast %cst_56 : f32 to vector<16x64xf32>
      %101 = arith.subf %100, %79 : vector<16x64xf32>
      %102 = arith.mulf %101, %79 : vector<16x64xf32>
      %103 = math.exp %102 : vector<16x64xf32>
      %104 = arith.mulf %99, %103 : vector<16x64xf32>
      %cst_57 = arith.constant 1.000000e+00 : f32
      %105 = vector.broadcast %cst_57 : f32 to vector<16x64xf32>
      %106 = arith.subf %105, %104 : vector<16x64xf32>
      %107 = arith.mulf %78, %106 : vector<16x64xf32>
      %cst_58 = arith.constant 1.000000e+00 : f32
      %108 = vector.broadcast %cst_58 : f32 to vector<16x64xf32>
      %109 = arith.addf %108, %107 : vector<16x64xf32>
      %110 = arith.mulf %71, %109 : vector<16x64xf32>
      %111 = arith.mulf %110, %69 : vector<16x64xf32>
      %112 = arith.truncf %111 : vector<16x64xf32> to vector<16x64xbf16>
      %c0_59 = arith.constant 0 : index
      %c0_60 = arith.constant 0 : index
      %113 = vector.load %arg11[%c0_59, %c0_60] : memref<64x32xbf16, #tpu.memory_space<vmem>>, vector<64x32xbf16>
      %cst_61 = arith.constant dense<0.000000e+00> : vector<16x32xf32>
      %114 = tpu.matmul %112, %113, %cst_61 {dimension_numbers = #tpu.dot_dimension_numbers<[1], [0], [0], [1], [0, 0, 1, 1], [], []>} : vector<16x64xbf16>, vector<64x32xbf16>, vector<16x32xf32> -> vector<16x32xf32>
      %c0_62 = arith.constant 0 : index
      %c0_63 = arith.constant 0 : index
      %115 = vector.load %arg3[%c0_62, %c0_63] : memref<16x32xf32, #tpu.memory_space<vmem>>, vector<16x32xf32>
      %c0_64 = arith.constant 0 : index
      %c0_65 = arith.constant 0 : index
      %116 = vector.load %arg5[%c0_64, %c0_65] : memref<16x32xf32, #tpu.memory_space<vmem>>, vector<16x32xf32>
      %c0_66 = arith.constant 0 : index
      %c0_67 = arith.constant 0 : index
      %117 = vector.load %arg12[%c0_66, %c0_67] : memref<16x32xf32, #tpu.memory_space<vmem>>, vector<16x32xf32>
      %118 = arith.addf %117, %114 : vector<16x32xf32>
      %119 = arith.mulf %116, %118 : vector<16x32xf32>
      %120 = arith.addf %115, %119 : vector<16x32xf32>
      %c0_68 = arith.constant 0 : index
      %c0_69 = arith.constant 0 : index
      %121 = vector.load %arg12[%c0_68, %c0_69] : memref<16x32xf32, #tpu.memory_space<vmem>>, vector<16x32xf32>
      tpu.vector_store %arg12[%c0_68, %c0_69], %120 {strides = array<i32>} : memref<16x32xf32, #tpu.memory_space<vmem>>, vector<16x32xf32>,
    } else {
    }
    return
  }
  func.func @transform_0(%arg0: i32, %arg1: i32) -> (i32, i32) {
    %c0_i32 = arith.constant 0 : i32
    %c0_i32_0 = arith.constant 0 : i32
    return %arg0, %c0_i32 : i32, i32
  }
  func.func @transform_1(%arg0: i32, %arg1: i32) -> (i32, i32) {
    %c0_i32 = arith.constant 0 : i32
    %c0_i32_0 = arith.constant 0 : i32
    return %arg0, %c0_i32 : i32, i32
  }
  func.func @transform_2(%arg0: i32, %arg1: i32) -> (i32, i32, i32) {
    %c0_i32 = arith.constant 0 : i32
    %c0_i32_0 = arith.constant 0 : i32
    return %arg1, %arg0, %c0_i32 : i32, i32, i32
  }
  func.func @transform_3(%arg0: i32, %arg1: i32) -> (i32, i32) {
    %c0_i32 = arith.constant 0 : i32
    %c0_i32_0 = arith.constant 0 : i32
    return %arg0, %c0_i32 : i32, i32
  }
  func.func @transform_4(%arg0: i32, %arg1: i32) -> (i32, i32, i32) {
    %c0_i32 = arith.constant 0 : i32
    %c0_i32_0 = arith.constant 0 : i32
    %c0_i32_1 = arith.constant 0 : i32
    return %arg1, %c0_i32, %c0_i32_0 : i32, i32, i32
  }
  func.func @transform_5(%arg0: i32, %arg1: i32) -> (i32, i32, i32) {
    %c0_i32 = arith.constant 0 : i32
    %c0_i32_0 = arith.constant 0 : i32
    %c0_i32_1 = arith.constant 0 : i32
    return %arg1, %c0_i32, %c0_i32_0 : i32, i32, i32
  }
  func.func @transform_6(%arg0: i32, %arg1: i32) -> (i32, i32, i32) {
    %c0_i32 = arith.constant 0 : i32
    %c0_i32_0 = arith.constant 0 : i32
    %c0_i32_1 = arith.constant 0 : i32
    return %arg1, %c0_i32, %c0_i32_0 : i32, i32, i32
  }
  func.func @transform_7(%arg0: i32, %arg1: i32) -> (i32, i32) {
    %c0_i32 = arith.constant 0 : i32
    %c0_i32_0 = arith.constant 0 : i32
    %c0_i32_1 = arith.constant 0 : i32
    return %c0_i32, %c0_i32_0 : i32, i32
  }
  func.func @transform_8(%arg0: i32, %arg1: i32) -> (i32, i32) {
    %c0_i32 = arith.constant 0 : i32
    %c0_i32_0 = arith.constant 0 : i32
    %c0_i32_1 = arith.constant 0 : i32
    return %c0_i32, %c0_i32_0 : i32, i32
  }
  func.func @transform_9(%arg0: i32, %arg1: i32) -> (i32, i32) {
    %c0_i32 = arith.constant 0 : i32
    %c0_i32_0 = arith.constant 0 : i32
    %c0_i32_1 = arith.constant 0 : i32
    return %c0_i32, %c0_i32_0 : i32, i32
  }
  func.func @transform_10(%arg0: i32, %arg1: i32) -> (i32, i32) {
    %c0_i32 = arith.constant 0 : i32
    %c0_i32_0 = arith.constant 0 : i32
    return %arg0, %c0_i32 : i32, i32
  }
}

</mosaic_0001>

<llo_original>
// kernel: dit_block_forward.3
$region0: #{dit_block_forward.3}
  #allocation0 [shape = 'u32[]', space=smem, size = 0x4, offset = 0x4, fixed_abs, tag = 'smem constant byte address 0x4 - core index']
  #allocation1 [shape = 'u32[72,128]{1,0:T(1,128)}', space=vmem, size = 0x9000, scoped, tag = 'internal scratch']
  %s0 = inlined_call_operand.hbm [shape: f32[2,32], index: 0, kind: input, shape index: {}]
  %s1 = inlined_call_operand.hbm [shape: bf16[32,192], index: 1, kind: input, shape index: {}]
  %s2 = inlined_call_operand.hbm [shape: f32[1,192], index: 2, kind: input, shape index: {}]
  %s3 = inlined_call_operand.vmem [shape: f32[2,192], index: 3, kind: output, shape index: {}]
  %s4 = sld [smem:[#allocation0]]
  $region34: #{dit_block_forward.3} parent=0
    _
  %s6 = ssub.s32 1, %s4
  %s7 = scalar_select 0, %s6, %s4
  $region1: #{dit_block_forward.3} parent=0
    #allocation2 [shape = 'u8[1024]{0}', space=vmem, size = 0x400, scoped, tag = 'input window, operand 0, single buffered']
    #allocation3 [shape = 's32[1]{0}', space=sflag, size = 0x4, scoped, tag = 'scoped memory for dit_block_forward.3']
    #allocation4 [shape = 'u8[16384]{0}', space=vmem, size = 0x4000, scoped, tag = 'input window, operand 1, single buffered']
    #allocation5 [shape = 's32[1]{0}', space=sflag, size = 0x4, scoped, tag = 'scoped memory for dit_block_forward.3']
    #allocation6 [shape = 'u8[1024]{0}', space=vmem, size = 0x400, scoped, tag = 'input window, operand 2, single buffered']
    %8 = vsyncpa [#allocation3], 0
    %9 = vsyncpa [#allocation5], 0
    // Predicated region
    $region2: #{dit_block_forward.3} parent=1 // pred_check
      _
    $region3: #{dit_block_forward.3} parent=1 // pred_check_branch
      %11 = sbr.rel (0) target = $region5
    $region4: #{dit_block_forward.3} parent=1 // pred_region
      %13 = vsyncadd [#allocation3], 0
      %s15 = sshll.u32 %s0, 4
      %s16 = int_to_ptr.hbm [resolvable:$true] %s15
      %s17 = sshll.u32 [#allocation2], 4
      %s18 = int_to_ptr.vmem [resolvable:$true] %s17
      %20 = dma.hbm_to_vmem [thread:$0]  %s16, 32, %s18, [#allocation3]
    $region5: #{dit_block_forward.3} parent=1 // pred_fallthru
      _
    // Predicated region
    $region6: #{dit_block_forward.3} parent=1 // pred_check
      _
    $region7: #{dit_block_forward.3} parent=1 // pred_check_branch
      %22 = sbr.rel (0) target = $region9
    $region8: #{dit_block_forward.3} parent=1 // pred_region
      %24 = vsyncadd [#allocation5], 0
      %s25 = sshll.u32 %s1, 4
      %s26 = int_to_ptr.hbm [resolvable:$true] %s25
      %s27 = sshll.u32 [#allocation4], 4
      %s28 = int_to_ptr.vmem [resolvable:$true] %s27
      %33 = dma.hbm_to_vmem [thread:$0]  %s26, 512, %s28, [#allocation5], 128, 128, 8
    $region9: #{dit_block_forward.3} parent=1 // pred_fallthru
      _
    // Predicated region
    $region10: #{dit_block_forward.3} parent=1 // pred_check
      _
    $region11: #{dit_block_forward.3} parent=1 // pred_check_branch
      %35 = sbr.rel (0) target = $region13
    $region12: #{dit_block_forward.3} parent=1 // pred_region
      %37 = vsyncadd [#allocation5], 0
      %s39 = sshll.u32 %s2, 4
      %s40 = int_to_ptr.hbm [resolvable:$true] %s39
      %s41 = sshll.u32 [#allocation6], 4
      %s42 = int_to_ptr.vmem [resolvable:$true] %s41
      %44 = dma.hbm_to_vmem [thread:$0]  %s40, 32, %s42, [#allocation5]
    $region13: #{dit_block_forward.3} parent=1 // pred_fallthru
      _
    // Predicated region
    $region14: #{dit_block_forward.3} parent=1 // pred_check
      _
    $region15: #{dit_block_forward.3} parent=1 // pred_check_branch
      %46 = sbr.rel (0) target = $region17
    $region16: #{dit_block_forward.3} parent=1 // pred_region
      %48 = dma.done [#allocation3], 32
    $region17: #{dit_block_forward.3} parent=1 // pred_fallthru
      _
    // Predicated region
    $region18: #{dit_block_forward.3} parent=1 // pred_check
      _
    $region19: #{dit_block_forward.3} parent=1 // pred_check_branch
      %50 = sbr.rel (0) target = $region21
    $region20: #{dit_block_forward.3} parent=1 // pred_region
      %52 = dma.done [#allocation5], 512
    $region21: #{dit_block_forward.3} parent=1 // pred_fallthru
      _
    // Predicated region
    $region22: #{dit_block_forward.3} parent=1 // pred_check
      _
    $region23: #{dit_block_forward.3} parent=1 // pred_check_branch
      %54 = sbr.rel (0) target = $region25
    $region24: #{dit_block_forward.3} parent=1 // pred_region
      %56 = dma.done [#allocation5], 32
    $region25: #{dit_block_forward.3} parent=1 // pred_fallthru
      _
    %v58 = vld [vmem:[#allocation2] sm:$0x3]
    %v59 = vxor.u32 %v58, 2147483648
    %v60 = vmul.f32 %v59, 1.442695
    %v61 = vpow.pop %v60
    %v62 = vadd.f32 %v61, 1.0
    %v63 = vrcp.pop %v62
    %v64 = vmul.f32 %v62, %v63
    %v65 = vsub.f32 1.0, %v64
    %v66 = vmul.f32 %v63, %v65
    %v67 = vadd.f32 %v63, %v66
    %vm68 = vweird.f32 %v62
    %vm69 = vweird.f32 %v63
    %vm70 = vmor %vm68, %vm69
    %v71 = vsel %vm70, %v63, %v67
    %v72 = vand.u32 2147483647, %v62
    %vm73 = vcmp.eq.f32.partialorder %v72, 8.507059e+37
    %v74 = vand.u32 %v62, 2147483648
    %v75 = vor.u32 1.1754944e-38, %v74
    %v76 = vsel %vm73, %v75, %v71
    %v77 = vmul.f32 1.0, %v76
    %v78 = vmul.f32 %v58, %v77
    %v79 = vpack.c.bf16 %v78, %v78
    %v80 = vld [vmem:[#allocation4] sm:$0xff]
    %v81 = vld [vmem:[#allocation4 + $0x8] sm:$0xff]
    %v82 = vld [vmem:[#allocation4 + $0x10] sm:$0xff]
    %v83 = vld [vmem:[#allocation4 + $0x18] sm:$0xff]
    %v84 = vld [vmem:[#allocation6] sm:$0x3]
    %v86 = vperm.slane %v84, 0
    %v87 = vperm.slane %v84, 1
    %v94 = vunpack.c.l.b16 %v80
    %v95 = vunpack.c.h.b16 %v80
    %v96 = vunpack.c.l.b16 %v81
    %v97 = vunpack.c.h.b16 %v81
    %v98 = vunpack.c.l.b16 %v82
    %v99 = vunpack.c.h.b16 %v82
    %v100 = vunpack.c.l.b16 %v83
    %v101 = vunpack.c.h.b16 %v83
    %v102 = vpack.c.b16 %v96, %v94
    %v103 = vpack.c.b16 %v97, %v95
    %v104 = vpack.c.b16 %v100, %v98
    %v105 = vpack.c.b16 %v101, %v99
    %vm110 = vcmask 261120
    %v112 = vsel %vm110, %v79, 0
    %114 = vmatpush.bf16.msra.mxu0 0
    %115 = vmatpush.bf16.msra.mxu0 0
    %116 = vmatpush.bf16.msra.mxu0 0
    %117 = vmatpush.bf16.msra.mxu0 0
    %118 = vmatpush.bf16.msra.mxu0 0
    %119 = vmatpush.bf16.msra.mxu0 0
    %120 = vmatpush.bf16.msra.mxu0 %v104
    %121 = vmatpush.bf16.msra.mxu0 %v102
    %122 = vmatmul.bf16.gmra.mxu0 %v112
    %v123 = vpop.f32.mrf.mxu0
    %v124 = vadd.f32 %v86, %v123
    %v125 = vpop.f32.mrf.mxu0
    %126 = vdwg.mxu0
    %127 = vmatpush.bf16.msra.mxu0 0
    %128 = vmatpush.bf16.msra.mxu0 0
    %129 = vmatpush.bf16.msra.mxu0 0
    %130 = vmatpush.bf16.msra.mxu0 0
    %131 = vmatpush.bf16.msra.mxu0 0
    %132 = vmatpush.bf16.msra.mxu0 0
    %133 = vmatpush.bf16.msra.mxu0 %v105
    %134 = vmatpush.bf16.msra.mxu0 %v103
    %135 = vmatmul.bf16.gmra.mxu0 %v112
    %v136 = vpop.f32.mrf.mxu0
    %v137 = vadd.f32 %v87, %v136
    %v138 = vpop.f32.mrf.mxu0
    %139 = vdwg.mxu0
    %v142 = vrot.slane %v137, 6
    %vm143 = vcmask 1041408
    %v144 = vsel %vm143, %v124, %v142
    %vm146 = vcmask 519170
    %vm147 = vmor %vm146, %vm143
    %148 = vst.msk [vmem:[%s3] sm:$0xf] %vm147, %v144
    // Predicated region
    $region26: #{dit_block_forward.3} parent=1 // pred_check
      _
    $region27: #{dit_block_forward.3} parent=1 // pred_check_branch
      %150 = sbr.rel (0) target = $region29
    $region28: #{dit_block_forward.3} parent=1 // pred_region
      _
    $region29: #{dit_block_forward.3} parent=1 // pred_fallthru
      _
    // Predicated region
    $region30: #{dit_block_forward.3} parent=1 // pred_check
      _
    $region31: #{dit_block_forward.3} parent=1 // pred_check_branch
      %152 = sbr.rel (0) target = $region33
    $region32: #{dit_block_forward.3} parent=1 // pred_region
      _
    $region33: #{dit_block_forward.3} parent=1 // pred_fallthru
      _
    %153 = vsyncpa [#allocation3], 1
    %154 = vsyncpa [#allocation5], 1

// kernel: dit_block_forward.4
$region0: #{dit_block_forward.4}
  #allocation0 [shape = 'u32[]', space=smem, size = 0x4, offset = 0x4, fixed_abs, tag = 'smem constant byte address 0x4 - core index']
  #allocation1 [shape = 'u32[72,128]{1,0:T(1,128)}', space=vmem, size = 0x9000, scoped, tag = 'internal scratch']
  #allocation2 [shape = 'bf16[4,8,8]{2,1,0:T(8,128)(2,1)}', space=vmem, size = 0x2000, scoped, tag = 'scratch operand']
  #allocation3 [shape = 'bf16[4,8,8]{2,1,0:T(8,128)(2,1)}', space=vmem, size = 0x2000, scoped, tag = 'scratch operand']
  #allocation4 [shape = 'bf16[4,8,8]{2,1,0:T(8,128)(2,1)}', space=vmem, size = 0x2000, scoped, tag = 'scratch operand']
  #allocation5 [shape = 'bf16[8,32]{1,0:T(8,128)(2,1)}', space=vmem, size = 0x800, scoped, tag = 'scratch operand']
  %s0 = inlined_call_operand.vmem [shape: f32[2,8,32], index: 0, kind: input, shape index: {}]
  %s1 = inlined_call_operand.vmem [shape: f32[2,1,192], index: 1, kind: input, shape index: {}]
  %s2 = inlined_call_operand.vmem [shape: bf16[32,96], index: 2, kind: input, shape index: {}]
  %s3 = inlined_call_operand.vmem [shape: f32[1,96], index: 3, kind: input, shape index: {}]
  %s4 = inlined_call_operand.hbm [shape: bf16[32,32], index: 4, kind: input, shape index: {}]
  %s5 = inlined_call_operand.vmem [shape: f32[1,32], index: 5, kind: input, shape index: {}]
  %s6 = inlined_call_operand.vmem [shape: f32[2,8,32], index: 6, kind: output, shape index: {}]
  %s7 = sld [smem:[#allocation0]]
  $region61: #{dit_block_forward.4} parent=0
    _
  %s9 = ssub.s32 1, %s7
  %s10 = scalar_select 0, %s9, %s7
  $region1: #{dit_block_forward.4} parent=0
    #allocation6 [shape = 'u8[8192]{0}', space=vmem, size = 0x2000, scoped, tag = 'input window, operand 4, single buffered']
    #allocation7 [shape = 's32[2]{0}', space=sflag, size = 0x8, scoped, tag = 'scoped memory for dit_block_forward.4']
    %11 = vsyncpa [#allocation7], 0
    loop: start=0, step=1, limit=4
    $region2: #{dit_block_forward.4} parent=1 // loop_pre_header
      _
    $region3: #{dit_block_forward.4} parent=1 // loop_header
      %s13 = sphi 0, %s17
      %p14 = scmp.ge.s32.totalorder %s13, 4
      %s23 = sphi 0, %s25
      %s26 = sphi 0, %s23
      %s27 = sphi 0, %s26
      %s43 = sphi 0, %s27
      %s49 = sphi 0, %s51
      %s52 = sphi 0, %s49
      %s53 = sphi 0, %s52
      %s69 = sphi 0, %s53
      %s73 = sphi 0, %s73
      %s75 = sphi 0, %s73
      %s76 = sphi 0, %s75
      %s90 = sphi 0, %s76
      %s94 = sphi 0, %s94
      %s96 = sphi 0, %s94
      %s97 = sphi 0, %s96
      %s111 = sphi 0, %s97
      %s115 = sphi 0, %s115
      %s117 = sphi 0, %s115
      %s118 = sphi 0, %s117
      %s132 = sphi 0, %s118
      %s136 = sphi 0, %s136
      %s138 = sphi 0, %s136
      %s139 = sphi 0, %s138
      %s153 = sphi 0, %s139
      %s159 = sphi 0, %s161
      %s162 = sphi 0, %s159
      %s163 = sphi 0, %s162
      %s179 = sphi 0, %s163
    $region4: #{dit_block_forward.4} parent=1 // loop_header_branch
      %16 = sbr.rel (%p14) target = $region8
    $region5: #{dit_block_forward.4} parent=1 // loop_body
      %s18 = ssub.s32 %s13, 1
      %s19 = ssub.s32 %s13, 2
      %s20 = sadd.s32 %s13, 1
      %s21 = ssub.s32 %s13, %s20
      %p22 = scmp.eq.s32.totalorder %s21, 0
      %s24 = sadd.s32 %s23, 1
      %s25 = scalar_select %p22, %s23, %s24
      %p28 = pneg %p22
      %p29 = scmp.eq.s32.totalorder %s13, 1
      %p30 = por %p28, %p29
      %p31 = scmp.ne.s32.totalorder %s23, %s26
      %p32 = scmp.eq.s32.totalorder %s13, 0
      %p33 = por %p31, %p32
      %p34 = scmp.ne.s32.totalorder %s23, %s26
      %p35 = scmp.eq.s32.totalorder %s18, 1
      %p36 = por %p34, %p35
      %p37 = scmp.ne.s32.totalorder %s26, %s27
      %p38 = scmp.eq.s32.totalorder %s18, 0
      %p39 = por %p37, %p38
      %p40 = scmp.ne.s32.totalorder %s26, %s27
      %p41 = scmp.eq.s32.totalorder %s19, 1
      %p42 = por %p40, %p41
      %p44 = scmp.ne.s32.totalorder %s27, %s43
      %p45 = scmp.eq.s32.totalorder %s19, 0
      %p46 = por %p44, %p45
      %s47 = ssub.s32 %s13, %s20
      %p48 = scmp.eq.s32.totalorder %s47, 0
      %s50 = sadd.s32 %s49, 1
      %s51 = scalar_select %p48, %s49, %s50
      %p54 = pneg %p48
      %p55 = scmp.eq.s32.totalorder %s13, 1
      %p56 = por %p54, %p55
      %p57 = scmp.ne.s32.totalorder %s49, %s52
      %p58 = scmp.eq.s32.totalorder %s13, 0
      %p59 = por %p57, %p58
      %p60 = scmp.ne.s32.totalorder %s49, %s52
      %p61 = scmp.eq.s32.totalorder %s18, 1
      %p62 = por %p60, %p61
      %p63 = scmp.ne.s32.totalorder %s52, %s53
      %p64 = scmp.eq.s32.totalorder %s18, 0
      %p65 = por %p63, %p64
      %p66 = scmp.ne.s32.totalorder %s52, %s53
      %p67 = scmp.eq.s32.totalorder %s19, 1
      %p68 = por %p66, %p67
      %p70 = scmp.ne.s32.totalorder %s53, %s69
      %p71 = scmp.eq.s32.totalorder %s19, 0
      %p72 = por %p70, %p71
      %s74 = sadd.s32 %s73, 1
      %p77 = scmp.eq.s32.totalorder %s13, 1
      %p78 = scmp.ne.s32.totalorder %s73, %s75
      %p79 = scmp.eq.s32.totalorder %s13, 0
      %p80 = por %p78, %p79
      %p81 = scmp.ne.s32.totalorder %s73, %s75
      %p82 = scmp.eq.s32.totalorder %s18, 1
      %p83 = por %p81, %p82
      %p84 = scmp.ne.s32.totalorder %s75, %s76
      %p85 = scmp.eq.s32.totalorder %s18, 0
      %p86 = por %p84, %p85
      %p87 = scmp.ne.s32.totalorder %s75, %s76
      %p88 = scmp.eq.s32.totalorder %s19, 1
      %p89 = por %p87, %p88
      %p91 = scmp.ne.s32.totalorder %s76, %s90
      %p92 = scmp.eq.s32.totalorder %s19, 0
      %p93 = por %p91, %p92
      %s95 = sadd.s32 %s94, 1
      %p98 = scmp.eq.s32.totalorder %s13, 1
      %p99 = scmp.ne.s32.totalorder %s94, %s96
      %p100 = scmp.eq.s32.totalorder %s13, 0
      %p101 = por %p99, %p100
      %p102 = scmp.ne.s32.totalorder %s94, %s96
      %p103 = scmp.eq.s32.totalorder %s18, 1
      %p104 = por %p102, %p103
      %p105 = scmp.ne.s32.totalorder %s96, %s97
      %p106 = scmp.eq.s32.totalorder %s18, 0
      %p107 = por %p105, %p106
      %p108 = scmp.ne.s32.totalorder %s96, %s97
      %p109 = scmp.eq.s32.totalorder %s19, 1
      %p110 = por %p108, %p109
      %p112 = scmp.ne.s32.totalorder %s97, %s111
      %p113 = scmp.eq.s32.totalorder %s19, 0
      %p114 = por %p112, %p113
      %s116 = sadd.s32 %s115, 1
      %p119 = scmp.eq.s32.totalorder %s13, 1
      %p120 = scmp.ne.s32.totalorder %s115, %s117
      %p121 = scmp.eq.s32.totalorder %s13, 0
      %p122 = por %p120, %p121
      %p123 = scmp.ne.s32.totalorder %s115, %s117
      %p124 = scmp.eq.s32.totalorder %s18, 1
      %p125 = por %p123, %p124
      %p126 = scmp.ne.s32.totalorder %s117, %s118
      %p127 = scmp.eq.s32.totalorder %s18, 0
      %p128 = por %p126, %p127
      %p129 = scmp.ne.s32.totalorder %s117, %s118
      %p130 = scmp.eq.s32.totalorder %s19, 1
      %p131 = por %p129, %p130
      %p133 = scmp.ne.s32.totalorder %s118, %s132
      %p134 = scmp.eq.s32.totalorder %s19, 0
      %p135 = por %p133, %p134
      %s137 = sadd.s32 %s136, 1
      %p140 = scmp.eq.s32.totalorder %s13, 1
      %p141 = scmp.ne.s32.totalorder %s136, %s138
      %p142 = scmp.eq.s32.totalorder %s13, 0
      %p143 = por %p141, %p142
      %p144 = scmp.ne.s32.totalorder %s136, %s138
      %p145 = scmp.eq.s32.totalorder %s18, 1
      %p146 = por %p144, %p145
      %p147 = scmp.ne.s32.totalorder %s138, %s139
      %p148 = scmp.eq.s32.totalorder %s18, 0
      %p149 = por %p147, %p148
      %p150 = scmp.ne.s32.totalorder %s138, %s139
      %p151 = scmp.eq.s32.totalorder %s19, 1
      %p152 = por %p150, %p151
      %p154 = scmp.ne.s32.totalorder %s139, %s153
      %p155 = scmp.eq.s32.totalorder %s19, 0
      %p156 = por %p154, %p155
      %s157 = ssub.s32 %s13, %s20
      %p158 = scmp.eq.s32.totalorder %s157, 0
      %s160 = sadd.s32 %s159, 1
      %s161 = scalar_select %p158, %s159, %s160
      %p164 = pneg %p158
      %p165 = scmp.eq.s32.totalorder %s13, 1
      %p166 = por %p164, %p165
      %p167 = scmp.ne.s32.totalorder %s159, %s162
      %p168 = scmp.eq.s32.totalorder %s13, 0
      %p169 = por %p167, %p168
      %p170 = scmp.ne.s32.totalorder %s159, %s162
      %p171 = scmp.eq.s32.totalorder %s18, 1
      %p172 = por %p170, %p171
      %p173 = scmp.ne.s32.totalorder %s162, %s163
      %p174 = scmp.eq.s32.totalorder %s18, 0
      %p175 = por %p173, %p174
      %p176 = scmp.ne.s32.totalorder %s162, %s163
      %p177 = scmp.eq.s32.totalorder %s19, 1
      %p178 = por %p176, %p177
      %p180 = scmp.ne.s32.totalorder %s163, %s179
      %p181 = scmp.eq.s32.totalorder %s19, 0
      %p182 = por %p180, %p181
      %p183 = scmp.le.s32.totalorder 1, %s13
      %p184 = scmp.lt.s32.totalorder %s13, 3
      %p185 = pnand %p183, %p184
      %p186 = pneg %p185
      // Predicated region
      $region9: #{dit_block_forward.4} parent=5 // pred_check
        _
      $region10: #{dit_block_forward.4} parent=5 // pred_check_branch
        %188 = sbr.rel (%p185) target = $region12
      $region11: #{dit_block_forward.4} parent=5 // pred_region
        %s189 = ssub.s32 %s13, 1
        // Predicated region
        $region13: #{dit_block_forward.4} parent=11 // pred_check
          %p190 = pneg %p86
        $region14: #{dit_block_forward.4} parent=11 // pred_check_branch
          %192 = sbr.rel (%p190) target = $region16
        $region15: #{dit_block_forward.4} parent=11 // pred_region
          _
        $region16: #{dit_block_forward.4} parent=11 // pred_fallthru
          _
        // Predicated region
        $region17: #{dit_block_forward.4} parent=11 // pred_check
          %p193 = pneg %p107
        $region18: #{dit_block_forward.4} parent=11 // pred_check_branch
          %195 = sbr.rel (%p193) target = $region20
        $region19: #{dit_block_forward.4} parent=11 // pred_region
          _
        $region20: #{dit_block_forward.4} parent=11 // pred_fallthru
          _
        // Predicated region
        $region21: #{dit_block_forward.4} parent=11 // pred_check
          %p196 = pneg %p128
        $region22: #{dit_block_forward.4} parent=11 // pred_check_branch
          %198 = sbr.rel (%p196) target = $region24
        $region23: #{dit_block_forward.4} parent=11 // pred_region
          %200 = vsyncadd [#allocation7], 0
          %s201 = sshll.u32 %s4, 4
          %s202 = int_to_ptr.hbm [resolvable:$true] %s201
          %s203 = sshll.u32 [#allocation6], 4
          %s204 = int_to_ptr.vmem [resolvable:$true] %s203
          %209 = dma.hbm_to_vmem [thread:$0]  %s202, 256, %s204, [#allocation7], 64, 64, 4
        $region24: #{dit_block_forward.4} parent=11 // pred_fallthru
          _
        // Predicated region
        $region25: #{dit_block_forward.4} parent=11 // pred_check
          %p210 = pneg %p149
        $region26: #{dit_block_forward.4} parent=11 // pred_check_branch
          %212 = sbr.rel (%p210) target = $region28
        $region27: #{dit_block_forward.4} parent=11 // pred_region
          _
        $region28: #{dit_block_forward.4} parent=11 // pred_fallthru
          _
      $region12: #{dit_block_forward.4} parent=5 // pred_fallthru
        _
      %p213 = scmp.lt.s32.totalorder %s13, 2
      // Predicated region
      $region29: #{dit_block_forward.4} parent=5 // pred_check
        %p214 = pneg %p213
      $region30: #{dit_block_forward.4} parent=5 // pred_check_branch
        %216 = sbr.rel (%p214) target = $region32
      $region31: #{dit_block_forward.4} parent=5 // pred_region
        // Predicated region
        $region33: #{dit_block_forward.4} parent=31 // pred_check
          %p217 = pneg %p33
        $region34: #{dit_block_forward.4} parent=31 // pred_check_branch
          %219 = sbr.rel (%p217) target = $region36
        $region35: #{dit_block_forward.4} parent=31 // pred_region
          %p220 = scmp.lt.s32.totalorder %s13, 1
          %s221 = scalar_select %p220, %s13, 1
          %s222 = smul.addr %s221, 8
          %s223 = scalar_lea.vmem %s0, %s222
        $region36: #{dit_block_forward.4} parent=31 // pred_fallthru
          _
        // Predicated region
        $region37: #{dit_block_forward.4} parent=31 // pred_check
          %p224 = pneg %p59
        $region38: #{dit_block_forward.4} parent=31 // pred_check_branch
          %226 = sbr.rel (%p224) target = $region40
        $region39: #{dit_block_forward.4} parent=31 // pred_region
          %p227 = scmp.lt.s32.totalorder %s13, 1
          %s228 = scalar_select %p227, %s13, 1
          %s229 = smul.addr %s228, 2
          %s230 = scalar_lea.vmem %s1, %s229
        $region40: #{dit_block_forward.4} parent=31 // pred_fallthru
          _
      $region32: #{dit_block_forward.4} parent=5 // pred_fallthru
        _
      %p231 = scmp.le.s32.totalorder 1, %s13
      %p232 = scmp.lt.s32.totalorder %s13, 3
      %p233 = pnand %p231, %p232
      %p234 = pneg %p233
      // Predicated region
      $region41: #{dit_block_forward.4} parent=5 // pred_check
        _
      $region42: #{dit_block_forward.4} parent=5 // pred_check_branch
        %236 = sbr.rel (%p233) target = $region44
      $region43: #{dit_block_forward.4} parent=5 // pred_region
        %s237 = ssub.s32 %s13, 1
        // Predicated region
        $region45: #{dit_block_forward.4} parent=43 // pred_check
          %p238 = pneg %p128
        $region46: #{dit_block_forward.4} parent=43 // pred_check_branch
          %240 = sbr.rel (%p238) target = $region48
        $region47: #{dit_block_forward.4} parent=43 // pred_region
          %242 = dma.done [#allocation7], 256
        $region48: #{dit_block_forward.4} parent=43 // pred_fallthru
          _
        %p243 = scmp.lt.s32.totalorder %s18, 1
        %s244 = scalar_select %p243, %s18, 1
        %s245 = smul.addr %s244, 8
        %s246 = scalar_lea.vmem %s0, %s245
        %p247 = pneg %p39
        %p248 = pneg %p36
        %p249 = scmp.lt.s32.totalorder %s18, 1
        %s250 = scalar_select %p249, %s18, 1
        %s251 = smul.addr %s250, 2
        %s252 = scalar_lea.vmem %s1, %s251
        %p253 = pneg %p65
        %p254 = pneg %p62
        %p255 = pneg %p86
        %p256 = pneg %p83
        %p257 = pneg %p107
        %p258 = pneg %p104
        %p259 = pneg %p128
        %p260 = pneg %p125
        %p261 = pneg %p149
        %p262 = pneg %p146
        %p263 = pneg %p175
        %p264 = pneg %p172
        %p265 = scmp.lt.s32.totalorder %s18, 1
        %s266 = scalar_select %p265, %s18, 1
        %s267 = smul.addr %s266, 8
        %s268 = scalar_lea.vmem %s6, %s267
        %p269 = scmp.lt.s32.totalorder %s18, 1
        %s270 = scalar_select %p269, %s18, 1
        %s271 = smul.addr %s270, 8
        %s272 = scalar_lea.vmem %s0, %s271
        %p273 = scmp.lt.s32.totalorder %s18, 1
        %s274 = scalar_select %p273, %s18, 1
        %s275 = smul.addr %s274, 2
        %s276 = scalar_lea.vmem %s1, %s275
        %p277 = scmp.lt.s32.totalorder %s18, 1
        %s278 = scalar_select %p277, %s18, 1
        %s279 = smul.addr %s278, 8
        %s280 = scalar_lea.vmem %s6, %s279
        %v282 = vld [vmem:[%s272] sm:$0xff]
        %v283 = vld [vmem:[%s276] sm:$0x3]
        %vm284 = vcmask 261120
        %v285 = vsel %vm284, %v282, 0.0
        %286 = vadd.xlane.f32.xlu0 %v285
        %v287 = vpop.xlane.xlu0 %286
        %v288 = vrcp.pop 32.0
        %v289 = vmul.f32 32.0, %v288
        %v290 = vsub.f32 1.0, %v289
        %v291 = vmul.f32 %v288, %v290
        %v292 = vadd.f32 %v288, %v291
        %vm293 = vweird.f32 %v288
        %v294 = vsel %vm293, %v288, %v292
        %v295 = vmul.f32 %v287, %v294
        %v296 = vsub.f32 %v282, %v295
        %v297 = vmul.f32 %v296, %v296
        %v298 = vsel %vm284, %v297, 0.0
        %299 = vadd.xlane.f32.xlu0 %v298
        %v300 = vpop.xlane.xlu0 %299
        %v301 = vmul.f32 %v300, %v294
        %v302 = vadd.f32 %v301, 1e-06
        %v303 = vrsqrt.pop %v302
        %v304 = vmul.f32 %v303, %v302
        %v305 = vmul.f32 %v304, %v303
        %v306 = vmul.f32 0.5, %v305
        %v307 = vsub.f32 1.5, %v306
        %v308 = vmul.f32 %v303, %v307
        %vm309 = vweird.f32 %v302
        %vm310 = vweird.f32 %v303
        %vm311 = vmor %vm309, %vm310
        %v312 = vsel %vm311, %v303, %v308
        %v313 = vmul.f32 %v296, %v312
        %v314 = vadd.f32 %v283, 1.0
        %v316 = vperm.slane %v314, 0
        %317 = vrot.lane.b32.xlu0 %v316, 96
        %v318 = vpop.permute.xlu0 %317
        %v320 = vmul.f32 %v313, %v318
        %v322 = vperm.slane %v283, 0
        %v324 = vadd.f32 %v320, %v322
        %v325 = vpack.c.bf16 %v324, %v324
        %v326 = vld [vmem:[%s2] sm:$0xf]
        %v327 = vld [vmem:[%s2 + $0x4] sm:$0xf]
        %v328 = vld [vmem:[%s2 + $0x8] sm:$0xf]
        %v329 = vld [vmem:[%s2 + $0xc] sm:$0xf]
        %v330 = vld [vmem:[%s3] sm:$0x1]
        %v332 = vperm.slane %v330, 0
        %v338 = vunpack.c.l.b16 %v326
        %v339 = vunpack.c.l.b16 %v327
        %v340 = vunpack.c.l.b16 %v328
        %v341 = vunpack.c.l.b16 %v329
        %v342 = vpack.c.b16 %v339, %v338
        %v343 = vpack.c.b16 %v341, %v340
        %v347 = vsel %vm284, %v325, 0
        %349 = vmatpush.bf16.msra.mxu0 0
        %350 = vmatpush.bf16.msra.mxu0 0
        %351 = vmatpush.bf16.msra.mxu0 0
        %352 = vmatpush.bf16.msra.mxu0 0
        %353 = vmatpush.bf16.msra.mxu0 0
        %354 = vmatpush.bf16.msra.mxu0 0
        %355 = vmatpush.bf16.msra.mxu0 %v343
        %356 = vmatpush.bf16.msra.mxu0 %v342
        %357 = vmatmul.bf16.gmra.mxu0 %v347
        %v358 = vpop.f32.mrf.mxu0
        %v359 = vadd.f32 %v332, %v358
        %v360 = vpop.f32.mrf.mxu0
        %361 = vdwg.mxu0
        %v362 = vpack.c.bf16 %v359, %v359
        %vm363 = vcmask 60416
        %364 = vst.msk [vmem:[#allocation2] sm:$0xf] %vm363, %v362
        %366 = vrot.lane.b32.xlu0 %v362, 96
        %v367 = vpop.permute.xlu0 %366
        %369 = vst.msk [vmem:[#allocation3] sm:$0xf] %vm363, %v367
        %370 = vrot.lane.b32.xlu0 %v362, 64
        %v371 = vpop.permute.xlu0 %370
        %373 = vst.msk [vmem:[#allocation4] sm:$0xf] %vm363, %v371
        %374 = vrot.lane.b32.xlu0 %v362, 120
        %v375 = vpop.permute.xlu0 %374
        %s377 = scalar_lea.vmem [#allocation2], 4
        %378 = vst.msk [vmem:[%s377] sm:$0xf] %vm363, %v375
        %379 = vrot.lane.b32.xlu0 %v362, 88
        %v380 = vpop.permute.xlu0 %379
        %s382 = scalar_lea.vmem [#allocation3], 4
        %383 = vst.msk [vmem:[%s382] sm:$0xf] %vm363, %v380
        %384 = vrot.lane.b32.xlu0 %v362, 56
        %v385 = vpop.permute.xlu0 %384
        %s387 = scalar_lea.vmem [#allocation4], 4
        %388 = vst.msk [vmem:[%s387] sm:$0xf] %vm363, %v385
        %389 = vrot.lane.b32.xlu0 %v362, 112
        %v390 = vpop.permute.xlu0 %389
        %s392 = scalar_lea.vmem [#allocation2], 8
        %393 = vst.msk [vmem:[%s392] sm:$0xf] %vm363, %v390
        %394 = vrot.lane.b32.xlu0 %v362, 80
        %v395 = vpop.permute.xlu0 %394
        %s397 = scalar_lea.vmem [#allocation3], 8
        %398 = vst.msk [vmem:[%s397] sm:$0xf] %vm363, %v395
        %399 = vrot.lane.b32.xlu0 %v362, 48
        %v400 = vpop.permute.xlu0 %399
        %s402 = scalar_lea.vmem [#allocation4], 8
        %403 = vst.msk [vmem:[%s402] sm:$0xf] %vm363, %v400
        %404 = vrot.lane.b32.xlu0 %v362, 104
        %v405 = vpop.permute.xlu0 %404
        %s407 = scalar_lea.vmem [#allocation2], 12
        %408 = vst.msk [vmem:[%s407] sm:$0xf] %vm363, %v405
        %409 = vrot.lane.b32.xlu0 %v362, 72
        %v410 = vpop.permute.xlu0 %409
        %s412 = scalar_lea.vmem [#allocation3], 12
        %413 = vst.msk [vmem:[%s412] sm:$0xf] %vm363, %v410
        %414 = vrot.lane.b32.xlu0 %v362, 40
        %v415 = vpop.permute.xlu0 %414
        %s417 = scalar_lea.vmem [#allocation4], 12
        %418 = vst.msk [vmem:[%s417] sm:$0xf] %vm363, %v415
        %v419 = vld [vmem:[#allocation2] sm:$0xf]
        %v420 = vld [vmem:[#allocation2 + $0x4] sm:$0xf]
        %v421 = vld [vmem:[#allocation2 + $0x8] sm:$0xf]
        %v422 = vld [vmem:[#allocation2 + $0xc] sm:$0xf]
        %v423 = vld [vmem:[#allocation3] sm:$0xf]
        %v424 = vld [vmem:[#allocation3 + $0x4] sm:$0xf]
        %v425 = vld [vmem:[#allocation3 + $0x8] sm:$0xf]
        %v426 = vld [vmem:[#allocation3 + $0xc] sm:$0xf]
        %v427 = vld [vmem:[#allocation4] sm:$0xf]
        %v428 = vld [vmem:[#allocation4 + $0x4] sm:$0xf]
        %v429 = vld [vmem:[#allocation4 + $0x8] sm:$0xf]
        %v430 = vld [vmem:[#allocation4 + $0xc] sm:$0xf]
        %vm431 = vcmask 64512
        %v433 = vsel %vm431, %v419, 0
        %v436 = vsel %vm431, %v423, 0
        %438 = vmatpush.bf16.xpose.msra.mxu0 0
        %439 = vmatpush.bf16.xpose.msra.mxu0 0
        %440 = vmatpush.bf16.xpose.msra.mxu0 0
        %441 = vmatpush.bf16.xpose.msra.mxu0 0
        %442 = vmatpush.bf16.xpose.msra.mxu0 0
        %443 = vmatpush.bf16.xpose.msra.mxu0 0
        %444 = vmatpush.bf16.xpose.msra.mxu0 0
        %445 = vmatpush.bf16.xpose.msra.mxu0 %v436
        %446 = vmatmul.bf16.gmra.mxu0 %v433
        %v447 = vpop.f32.mrf.mxu0
        %v448 = vadd.f32 0.0, %v447
        %v449 = vpop.f32.mrf.mxu0
        %450 = vdwg.mxu0
        %v452 = vsel %vm431, %v420, 0
        %v455 = vsel %vm431, %v424, 0
        %457 = vmatpush.bf16.xpose.msra.mxu0 0
        %458 = vmatpush.bf16.xpose.msra.mxu0 0
        %459 = vmatpush.bf16.xpose.msra.mxu0 0
        %460 = vmatpush.bf16.xpose.msra.mxu0 0
        %461 = vmatpush.bf16.xpose.msra.mxu0 0
        %462 = vmatpush.bf16.xpose.msra.mxu0 0
        %463 = vmatpush.bf16.xpose.msra.mxu0 0
        %464 = vmatpush.bf16.xpose.msra.mxu0 %v455
        %465 = vmatmul.bf16.gmra.mxu0 %v452
        %v466 = vpop.f32.mrf.mxu0
        %v467 = vadd.f32 0.0, %v466
        %v468 = vpop.f32.mrf.mxu0
        %469 = vdwg.mxu0
        %v471 = vsel %vm431, %v421, 0
        %v474 = vsel %vm431, %v425, 0
        %476 = vmatpush.bf16.xpose.msra.mxu0 0
        %477 = vmatpush.bf16.xpose.msra.mxu0 0
        %478 = vmatpush.bf16.xpose.msra.mxu0 0
        %479 = vmatpush.bf16.xpose.msra.mxu0 0
        %480 = vmatpush.bf16.xpose.msra.mxu0 0
        %481 = vmatpush.bf16.xpose.msra.mxu0 0
        %482 = vmatpush.bf16.xpose.msra.mxu0 0
        %483 = vmatpush.bf16.xpose.msra.mxu0 %v474
        %484 = vmatmul.bf16.gmra.mxu0 %v471
        %v485 = vpop.f32.mrf.mxu0
        %v486 = vadd.f32 0.0, %v485
        %v487 = vpop.f32.mrf.mxu0
        %488 = vdwg.mxu0
        %v490 = vsel %vm431, %v422, 0
        %v493 = vsel %vm431, %v426, 0
        %495 = vmatpush.bf16.xpose.msra.mxu0 0
        %496 = vmatpush.bf16.xpose.msra.mxu0 0
        %497 = vmatpush.bf16.xpose.msra.mxu0 0
        %498 = vmatpush.bf16.xpose.msra.mxu0 0
        %499 = vmatpush.bf16.xpose.msra.mxu0 0
        %500 = vmatpush.bf16.xpose.msra.mxu0 0
        %501 = vmatpush.bf16.xpose.msra.mxu0 0
        %502 = vmatpush.bf16.xpose.msra.mxu0 %v493
        %503 = vmatmul.bf16.gmra.mxu0 %v490
        %v504 = vpop.f32.mrf.mxu0
        %v505 = vadd.f32 0.0, %v504
        %v506 = vpop.f32.mrf.mxu0
        %507 = vdwg.mxu0
        %v508 = vmul.f32 %v448, 0.35355338
        %v509 = vmul.f32 %v467, 0.35355338
        %v510 = vmul.f32 %v486, 0.35355338
        %v511 = vmul.f32 %v505, 0.35355338
        %v512 = vsel %vm431, %v508, -inf
        %513 = vmax.xlane.f32.xlu0 %v512
        %v514 = vpop.xlane.xlu0 %513
        %v515 = vsel %vm431, %v509, -inf
        %516 = vmax.xlane.f32.xlu0 %v515
        %v517 = vpop.xlane.xlu0 %516
        %v518 = vsel %vm431, %v510, -inf
        %519 = vmax.xlane.f32.xlu0 %v518
        %v520 = vpop.xlane.xlu0 %519
        %v521 = vsel %vm431, %v511, -inf
        %522 = vmax.xlane.f32.xlu0 %v521
        %v523 = vpop.xlane.xlu0 %522
        %v524 = vsub.f32 %v508, %v514
        %v525 = vsub.f32 %v509, %v517
        %v526 = vsub.f32 %v510, %v520
        %v527 = vsub.f32 %v511, %v523
        %v528 = vmul.f32 %v524, 1.442695
        %v529 = vpow.pop %v528
        %v530 = vmul.f32 %v525, 1.442695
        %v531 = vpow.pop %v530
        %v532 = vmul.f32 %v526, 1.442695
        %v533 = vpow.pop %v532
        %v534 = vmul.f32 %v527, 1.442695
        %v535 = vpow.pop %v534
        %v536 = vsel %vm431, %v529, 0.0
        %537 = vadd.xlane.f32.xlu0 %v536
        %v538 = vpop.xlane.xlu0 %537
        %v539 = vsel %vm431, %v531, 0.0
        %540 = vadd.xlane.f32.xlu0 %v539
        %v541 = vpop.xlane.xlu0 %540
        %v542 = vsel %vm431, %v533, 0.0
        %543 = vadd.xlane.f32.xlu0 %v542
        %v544 = vpop.xlane.xlu0 %543
        %v545 = vsel %vm431, %v535, 0.0
        %546 = vadd.xlane.f32.xlu0 %v545
        %v547 = vpop.xlane.xlu0 %546
        %v548 = vrcp.pop %v538
        %v549 = vrcp.pop %v541
        %v550 = vrcp.pop %v544
        %v551 = vrcp.pop %v547
        %v552 = vmul.f32 %v529, %v548
        %v553 = vmul.f32 %v531, %v549
        %v554 = vmul.f32 %v533, %v550
        %v555 = vmul.f32 %v535, %v551
        %v556 = vpack.c.bf16 %v552, %v552
        %v557 = vpack.c.bf16 %v553, %v553
        %v558 = vpack.c.bf16 %v554, %v554
        %v559 = vpack.c.bf16 %v555, %v555
        %v561 = vsel %vm431, %v556, 0
        %vm563 = vcmask 1043456
        %v565 = vsel %vm563, %v427, 0
        %567 = vmatpush.bf16.msra.mxu0 0
        %568 = vmatpush.bf16.msra.mxu0 0
        %569 = vmatpush.bf16.msra.mxu0 0
        %570 = vmatpush.bf16.msra.mxu0 0
        %571 = vmatpush.bf16.msra.mxu0 0
        %572 = vmatpush.bf16.msra.mxu0 0
        %573 = vmatpush.bf16.msra.mxu0 0
        %574 = vmatpush.bf16.msra.mxu0 %v565
        %575 = vmatmul.bf16.gmra.mxu0 %v561
        %v576 = vpop.f32.mrf.mxu0
        %v577 = vadd.f32 0.0, %v576
        %v578 = vpop.f32.mrf.mxu0
        %579 = vdwg.mxu0
        %v581 = vsel %vm431, %v557, 0
        %v584 = vsel %vm563, %v428, 0
        %586 = vmatpush.bf16.msra.mxu0 0
        %587 = vmatpush.bf16.msra.mxu0 0
        %588 = vmatpush.bf16.msra.mxu0 0
        %589 = vmatpush.bf16.msra.mxu0 0
        %590 = vmatpush.bf16.msra.mxu0 0
        %591 = vmatpush.bf16.msra.mxu0 0
        %592 = vmatpush.bf16.msra.mxu0 0
        %593 = vmatpush.bf16.msra.mxu0 %v584
        %594 = vmatmul.bf16.gmra.mxu0 %v581
        %v595 = vpop.f32.mrf.mxu0
        %v596 = vadd.f32 0.0, %v595
        %v597 = vpop.f32.mrf.mxu0
        %598 = vdwg.mxu0
        %v600 = vsel %vm431, %v558, 0
        %v603 = vsel %vm563, %v429, 0
        %605 = vmatpush.bf16.msra.mxu0 0
        %606 = vmatpush.bf16.msra.mxu0 0
        %607 = vmatpush.bf16.msra.mxu0 0
        %608 = vmatpush.bf16.msra.mxu0 0
        %609 = vmatpush.bf16.msra.mxu0 0
        %610 = vmatpush.bf16.msra.mxu0 0
        %611 = vmatpush.bf16.msra.mxu0 0
        %612 = vmatpush.bf16.msra.mxu0 %v603
        %613 = vmatmul.bf16.gmra.mxu0 %v600
        %v614 = vpop.f32.mrf.mxu0
        %v615 = vadd.f32 0.0, %v614
        %v616 = vpop.f32.mrf.mxu0
        %617 = vdwg.mxu0
        %v619 = vsel %vm431, %v559, 0
        %v622 = vsel %vm563, %v430, 0
        %624 = vmatpush.bf16.msra.mxu0 0
        %625 = vmatpush.bf16.msra.mxu0 0
        %626 = vmatpush.bf16.msra.mxu0 0
        %627 = vmatpush.bf16.msra.mxu0 0
        %628 = vmatpush.bf16.msra.mxu0 0
        %629 = vmatpush.bf16.msra.mxu0 0
        %630 = vmatpush.bf16.msra.mxu0 0
        %631 = vmatpush.bf16.msra.mxu0 %v622
        %632 = vmatmul.bf16.gmra.mxu0 %v619
        %v633 = vpop.f32.mrf.mxu0
        %v634 = vadd.f32 0.0, %v633
        %v635 = vpop.f32.mrf.mxu0
        %636 = vdwg.mxu0
        %v637 = vpack.c.bf16 %v577, %v577
        %638 = vst.msk [vmem:[#allocation5] sm:$0xf] %vm363, %v637
        %v639 = vpack.c.bf16 %v596, %v596
        %641 = vrot.lane.b32.xlu0 %v639, 8
        %v642 = vpop.permute.xlu0 %641
        %vm644 = vcmask 126016
        %645 = vst.msk [vmem:[#allocation5] sm:$0xf] %vm644, %v642
        %v646 = vpack.c.bf16 %v615, %v615
        %648 = vrot.lane.b32.xlu0 %v646, 16
        %v649 = vpop.permute.xlu0 %648
        %vm651 = vcmask 191616
        %652 = vst.msk [vmem:[#allocation5] sm:$0xf] %vm651, %v649
        %v653 = vpack.c.bf16 %v634, %v634
        %655 = vrot.lane.b32.xlu0 %v653, 24
        %v656 = vpop.permute.xlu0 %655
        %vm658 = vcmask 257216
        %659 = vst.msk [vmem:[#allocation5] sm:$0xf] %vm658, %v656
        %v660 = vld [vmem:[#allocation5] sm:$0xf]
        %v661 = vld [vmem:[#allocation6] sm:$0xf]
        %v662 = vld [vmem:[#allocation6 + $0x4] sm:$0xf]
        %v663 = vld [vmem:[#allocation6 + $0x8] sm:$0xf]
        %v664 = vld [vmem:[#allocation6 + $0xc] sm:$0xf]
        %v665 = vld [vmem:[%s5] sm:$0x1]
        %v667 = vperm.slane %v665, 0
        %v673 = vunpack.c.l.b16 %v661
        %v674 = vunpack.c.l.b16 %v662
        %v675 = vunpack.c.l.b16 %v663
        %v676 = vunpack.c.l.b16 %v664
        %v677 = vpack.c.b16 %v674, %v673
        %v678 = vpack.c.b16 %v676, %v675
        %v682 = vsel %vm284, %v660, 0
        %684 = vmatpush.bf16.msra.mxu0 0
        %685 = vmatpush.bf16.msra.mxu0 0
        %686 = vmatpush.bf16.msra.mxu0 0
        %687 = vmatpush.bf16.msra.mxu0 0
        %688 = vmatpush.bf16.msra.mxu0 0
        %689 = vmatpush.bf16.msra.mxu0 0
        %690 = vmatpush.bf16.msra.mxu0 %v678
        %691 = vmatpush.bf16.msra.mxu0 %v677
        %692 = vmatmul.bf16.gmra.mxu0 %v682
        %v693 = vpop.f32.mrf.mxu0
        %v694 = vadd.f32 %v667, %v693
        %v695 = vpop.f32.mrf.mxu0
        %696 = vdwg.mxu0
        %698 = vrot.lane.b32.xlu0 %v694, 64
        %v699 = vpop.permute.xlu0 %698
        %v701 = vmul.f32 %v322, %v699
        %703 = vrot.lane.b32.xlu0 %v701, 64
        %v704 = vpop.permute.xlu0 %703
        %v706 = vadd.f32 %v282, %v704
        %707 = vst.msk [vmem:[%s280] sm:$0xff] %vm284, %v706
        %p708 = scmp.lt.s32.totalorder %s18, 1
        %s709 = scalar_select %p708, %s18, 1
        %s710 = smul.addr %s709, 8
        %s711 = scalar_lea.vmem %s6, %s710
        // Predicated region
        $region49: #{dit_block_forward.4} parent=43 // pred_check
          %p712 = pneg %p172
        $region50: #{dit_block_forward.4} parent=43 // pred_check_branch
          %714 = sbr.rel (%p712) target = $region52
        $region51: #{dit_block_forward.4} parent=43 // pred_region
          _
        $region52: #{dit_block_forward.4} parent=43 // pred_fallthru
          _
      $region44: #{dit_block_forward.4} parent=5 // pred_fallthru
        _
      %p715 = scmp.le.s32.totalorder 2, %s13
      // Predicated region
      $region53: #{dit_block_forward.4} parent=5 // pred_check
        %p716 = pneg %p715
      $region54: #{dit_block_forward.4} parent=5 // pred_check_branch
        %718 = sbr.rel (%p716) target = $region56
      $region55: #{dit_block_forward.4} parent=5 // pred_region
        %s719 = ssub.s32 %s13, 2
        // Predicated region
        $region57: #{dit_block_forward.4} parent=55 // pred_check
          %p720 = pneg %p178
        $region58: #{dit_block_forward.4} parent=55 // pred_check_branch
          %722 = sbr.rel (%p720) target = $region60
        $region59: #{dit_block_forward.4} parent=55 // pred_region
          %p723 = scmp.lt.s32.totalorder %s19, 1
          %s724 = scalar_select %p723, %s19, 1
          %s725 = smul.addr %s724, 8
          %s726 = scalar_lea.vmem %s6, %s725
        $region60: #{dit_block_forward.4} parent=55 // pred_fallthru
          _
      $region56: #{dit_block_forward.4} parent=5 // pred_fallthru
        _
    $region6: #{dit_block_forward.4} parent=1 // loop_footer
      %s17 = sadd.s32 1, %s13
    $region7: #{dit_block_forward.4} parent=1 // loop_footer_branch
      %12 = sbr.rel target = $region3
    $region8: #{dit_block_forward.4} parent=1 // loop_exit
      _
    %727 = vsyncpa [#allocation7], 1
    %s728 = scalar_lea.sflag [#allocation7], 1
    %729 = vsyncpa %s728, 1

// kernel: dit_block_forward.5
$region0: #{dit_block_forward.5}
  #allocation0 [shape = 'u32[]', space=smem, size = 0x4, offset = 0x4, fixed_abs, tag = 'smem constant byte address 0x4 - core index']
  #allocation1 [shape = 'u32[72,128]{1,0:T(1,128)}', space=vmem, size = 0x9000, scoped, tag = 'internal scratch']
  %s0 = inlined_call_operand.vmem [shape: bf16[16,32], index: 0, kind: input, shape index: {}]
  %s1 = inlined_call_operand.vmem [shape: f32[16,32], index: 1, kind: input, shape index: {}]
  %s2 = inlined_call_operand.vmem [shape: f32[8,16,1], index: 2, kind: input, shape index: {}]
  %s3 = inlined_call_operand.vmem [shape: f32[16,32], index: 3, kind: input, shape index: {}]
  %s4 = inlined_call_operand.vmem [shape: bf16[8,32,128], index: 4, kind: input, shape index: {}]
  %s5 = inlined_call_operand.vmem [shape: bf16[8,32,128], index: 5, kind: input, shape index: {}]
  %s6 = inlined_call_operand.vmem [shape: bf16[8,128,32], index: 6, kind: input, shape index: {}]
  %s7 = inlined_call_operand.vmem [shape: bf16[32,64], index: 7, kind: input, shape index: {}]
  %s8 = inlined_call_operand.vmem [shape: bf16[32,64], index: 8, kind: input, shape index: {}]
  %s9 = inlined_call_operand.vmem [shape: bf16[64,32], index: 9, kind: input, shape index: {}]
  %s10 = inlined_call_operand.hbm [shape: f32[16,32], index: 10, kind: output, shape index: {}]
  %s11 = sld [smem:[#allocation0]]
  $region81: #{dit_block_forward.5} parent=0
    _
  %s13 = ssub.s32 1, %s11
  %s14 = scalar_select 0, %s13, %s11
  $region1: #{dit_block_forward.5} parent=0
    #allocation2 [shape = 'u8[8192]{0}', space=vmem, size = 0x2000, scoped, tag = 'output window, operand 0, single buffered']
    #allocation3 [shape = 's32[2]{0}', space=sflag, size = 0x8, scoped, tag = 'scoped memory for dit_block_forward.5']
    %15 = vsyncpa [#allocation3], 0
    loop: start=0, step=1, limit=10
    $region2: #{dit_block_forward.5} parent=1 // loop_pre_header
      _
    $region3: #{dit_block_forward.5} parent=1 // loop_header
      %s17 = sphi 0, %s21
      %p18 = scmp.ge.s32.totalorder %s17, 10
      %s24 = sphi 0, %s36
      %s25 = sphi 0, %s32
      %s26 = sphi 0, %s24
      %s27 = sphi 0, %s25
      %s28 = sphi 0, %s26
      %s29 = sphi 0, %s27
      %s39 = sphi 0, %s41
      %s42 = sphi 0, %s39
      %s43 = sphi 0, %s42
      %s59 = sphi 0, %s43
      %s65 = sphi 0, %s67
      %s68 = sphi 0, %s65
      %s69 = sphi 0, %s68
      %s85 = sphi 0, %s69
      %s93 = sphi 0, %s95
      %s96 = sphi 0, %s93
      %s97 = sphi 0, %s96
      %s113 = sphi 0, %s97
      %s119 = sphi 0, %s121
      %s122 = sphi 0, %s119
      %s123 = sphi 0, %s122
      %s139 = sphi 0, %s123
      %s145 = sphi 0, %s147
      %s148 = sphi 0, %s145
      %s149 = sphi 0, %s148
      %s165 = sphi 0, %s149
      %s171 = sphi 0, %s173
      %s174 = sphi 0, %s171
      %s175 = sphi 0, %s174
      %s191 = sphi 0, %s175
      %s197 = sphi 0, %s199
      %s200 = sphi 0, %s197
      %s201 = sphi 0, %s200
      %s217 = sphi 0, %s201
      %s221 = sphi 0, %s221
      %s223 = sphi 0, %s221
      %s224 = sphi 0, %s223
      %s238 = sphi 0, %s224
      %s242 = sphi 0, %s242
      %s244 = sphi 0, %s242
      %s245 = sphi 0, %s244
      %s259 = sphi 0, %s245
      %s263 = sphi 0, %s263
      %s265 = sphi 0, %s263
      %s266 = sphi 0, %s265
      %s280 = sphi 0, %s266
      %s286 = sphi 0, %s288
      %s289 = sphi 0, %s286
      %s290 = sphi 0, %s289
      %s306 = sphi 0, %s290
    $region4: #{dit_block_forward.5} parent=1 // loop_header_branch
      %20 = sbr.rel (%p18) target = $region8
    $region5: #{dit_block_forward.5} parent=1 // loop_body
      %s22 = ssub.s32 %s17, 1
      %s23 = ssub.s32 %s17, 2
      %s30 = sadd.s32 1, %s25
      %p31 = scmp.ge.s32.totalorder %s30, 8
      %s32 = scalar_select %p31, 0, %s30
      %s33 = sadd.s32 1, %s24
      %s34 = scalar_select %p31, %s33, %s24
      %p35 = scmp.ge.s32.totalorder %s34, 1
      %s36 = scalar_select %p35, 0, %s34
      %s37 = ssub.s32 %s24, %s36
      %p38 = scmp.eq.s32.totalorder %s37, 0
      %s40 = sadd.s32 %s39, 1
      %s41 = scalar_select %p38, %s39, %s40
      %p44 = pneg %p38
      %p45 = scmp.eq.s32.totalorder %s17, 7
      %p46 = por %p44, %p45
      %p47 = scmp.ne.s32.totalorder %s39, %s42
      %p48 = scmp.eq.s32.totalorder %s17, 0
      %p49 = por %p47, %p48
      %p50 = scmp.ne.s32.totalorder %s39, %s42
      %p51 = scmp.eq.s32.totalorder %s22, 7
      %p52 = por %p50, %p51
      %p53 = scmp.ne.s32.totalorder %s42, %s43
      %p54 = scmp.eq.s32.totalorder %s22, 0
      %p55 = por %p53, %p54
      %p56 = scmp.ne.s32.totalorder %s42, %s43
      %p57 = scmp.eq.s32.totalorder %s23, 7
      %p58 = por %p56, %p57
      %p60 = scmp.ne.s32.totalorder %s43, %s59
      %p61 = scmp.eq.s32.totalorder %s23, 0
      %p62 = por %p60, %p61
      %s63 = ssub.s32 %s24, %s36
      %p64 = scmp.eq.s32.totalorder %s63, 0
      %s66 = sadd.s32 %s65, 1
      %s67 = scalar_select %p64, %s65, %s66
      %p70 = pneg %p64
      %p71 = scmp.eq.s32.totalorder %s17, 7
      %p72 = por %p70, %p71
      %p73 = scmp.ne.s32.totalorder %s65, %s68
      %p74 = scmp.eq.s32.totalorder %s17, 0
      %p75 = por %p73, %p74
      %p76 = scmp.ne.s32.totalorder %s65, %s68
      %p77 = scmp.eq.s32.totalorder %s22, 7
      %p78 = por %p76, %p77
      %p79 = scmp.ne.s32.totalorder %s68, %s69
      %p80 = scmp.eq.s32.totalorder %s22, 0
      %p81 = por %p79, %p80
      %p82 = scmp.ne.s32.totalorder %s68, %s69
      %p83 = scmp.eq.s32.totalorder %s23, 7
      %p84 = por %p82, %p83
      %p86 = scmp.ne.s32.totalorder %s69, %s85
      %p87 = scmp.eq.s32.totalorder %s23, 0
      %p88 = por %p86, %p87
      %s89 = ssub.s32 %s25, %s32
      %s90 = ssub.s32 %s24, %s36
      %s91 = sor.u32 %s89, %s90
      %p92 = scmp.eq.s32.totalorder %s91, 0
      %s94 = sadd.s32 %s93, 1
      %s95 = scalar_select %p92, %s93, %s94
      %p98 = pneg %p92
      %p99 = scmp.eq.s32.totalorder %s17, 7
      %p100 = por %p98, %p99
      %p101 = scmp.ne.s32.totalorder %s93, %s96
      %p102 = scmp.eq.s32.totalorder %s17, 0
      %p103 = por %p101, %p102
      %p104 = scmp.ne.s32.totalorder %s93, %s96
      %p105 = scmp.eq.s32.totalorder %s22, 7
      %p106 = por %p104, %p105
      %p107 = scmp.ne.s32.totalorder %s96, %s97
      %p108 = scmp.eq.s32.totalorder %s22, 0
      %p109 = por %p107, %p108
      %p110 = scmp.ne.s32.totalorder %s96, %s97
      %p111 = scmp.eq.s32.totalorder %s23, 7
      %p112 = por %p110, %p111
      %p114 = scmp.ne.s32.totalorder %s97, %s113
      %p115 = scmp.eq.s32.totalorder %s23, 0
      %p116 = por %p114, %p115
      %s117 = ssub.s32 %s24, %s36
      %p118 = scmp.eq.s32.totalorder %s117, 0
      %s120 = sadd.s32 %s119, 1
      %s121 = scalar_select %p118, %s119, %s120
      %p124 = pneg %p118
      %p125 = scmp.eq.s32.totalorder %s17, 7
      %p126 = por %p124, %p125
      %p127 = scmp.ne.s32.totalorder %s119, %s122
      %p128 = scmp.eq.s32.totalorder %s17, 0
      %p129 = por %p127, %p128
      %p130 = scmp.ne.s32.totalorder %s119, %s122
      %p131 = scmp.eq.s32.totalorder %s22, 7
      %p132 = por %p130, %p131
      %p133 = scmp.ne.s32.totalorder %s122, %s123
      %p134 = scmp.eq.s32.totalorder %s22, 0
      %p135 = por %p133, %p134
      %p136 = scmp.ne.s32.totalorder %s122, %s123
      %p137 = scmp.eq.s32.totalorder %s23, 7
      %p138 = por %p136, %p137
      %p140 = scmp.ne.s32.totalorder %s123, %s139
      %p141 = scmp.eq.s32.totalorder %s23, 0
      %p142 = por %p140, %p141
      %s143 = ssub.s32 %s25, %s32
      %p144 = scmp.eq.s32.totalorder %s143, 0
      %s146 = sadd.s32 %s145, 1
      %s147 = scalar_select %p144, %s145, %s146
      %p150 = pneg %p144
      %p151 = scmp.eq.s32.totalorder %s17, 7
      %p152 = por %p150, %p151
      %p153 = scmp.ne.s32.totalorder %s145, %s148
      %p154 = scmp.eq.s32.totalorder %s17, 0
      %p155 = por %p153, %p154
      %p156 = scmp.ne.s32.totalorder %s145, %s148
      %p157 = scmp.eq.s32.totalorder %s22, 7
      %p158 = por %p156, %p157
      %p159 = scmp.ne.s32.totalorder %s148, %s149
      %p160 = scmp.eq.s32.totalorder %s22, 0
      %p161 = por %p159, %p160
      %p162 = scmp.ne.s32.totalorder %s148, %s149
      %p163 = scmp.eq.s32.totalorder %s23, 7
      %p164 = por %p162, %p163
      %p166 = scmp.ne.s32.totalorder %s149, %s165
      %p167 = scmp.eq.s32.totalorder %s23, 0
      %p168 = por %p166, %p167
      %s169 = ssub.s32 %s25, %s32
      %p170 = scmp.eq.s32.totalorder %s169, 0
      %s172 = sadd.s32 %s171, 1
      %s173 = scalar_select %p170, %s171, %s172
      %p176 = pneg %p170
      %p177 = scmp.eq.s32.totalorder %s17, 7
      %p178 = por %p176, %p177
      %p179 = scmp.ne.s32.totalorder %s171, %s174
      %p180 = scmp.eq.s32.totalorder %s17, 0
      %p181 = por %p179, %p180
      %p182 = scmp.ne.s32.totalorder %s171, %s174
      %p183 = scmp.eq.s32.totalorder %s22, 7
      %p184 = por %p182, %p183
      %p185 = scmp.ne.s32.totalorder %s174, %s175
      %p186 = scmp.eq.s32.totalorder %s22, 0
      %p187 = por %p185, %p186
      %p188 = scmp.ne.s32.totalorder %s174, %s175
      %p189 = scmp.eq.s32.totalorder %s23, 7
      %p190 = por %p188, %p189
      %p192 = scmp.ne.s32.totalorder %s175, %s191
      %p193 = scmp.eq.s32.totalorder %s23, 0
      %p194 = por %p192, %p193
      %s195 = ssub.s32 %s25, %s32
      %p196 = scmp.eq.s32.totalorder %s195, 0
      %s198 = sadd.s32 %s197, 1
      %s199 = scalar_select %p196, %s197, %s198
      %p202 = pneg %p196
      %p203 = scmp.eq.s32.totalorder %s17, 7
      %p204 = por %p202, %p203
      %p205 = scmp.ne.s32.totalorder %s197, %s200
      %p206 = scmp.eq.s32.totalorder %s17, 0
      %p207 = por %p205, %p206
      %p208 = scmp.ne.s32.totalorder %s197, %s200
      %p209 = scmp.eq.s32.totalorder %s22, 7
      %p210 = por %p208, %p209
      %p211 = scmp.ne.s32.totalorder %s200, %s201
      %p212 = scmp.eq.s32.totalorder %s22, 0
      %p213 = por %p211, %p212
      %p214 = scmp.ne.s32.totalorder %s200, %s201
      %p215 = scmp.eq.s32.totalorder %s23, 7
      %p216 = por %p214, %p215
      %p218 = scmp.ne.s32.totalorder %s201, %s217
      %p219 = scmp.eq.s32.totalorder %s23, 0
      %p220 = por %p218, %p219
      %s222 = sadd.s32 %s221, 1
      %p225 = scmp.eq.s32.totalorder %s17, 7
      %p226 = scmp.ne.s32.totalorder %s221, %s223
      %p227 = scmp.eq.s32.totalorder %s17, 0
      %p228 = por %p226, %p227
      %p229 = scmp.ne.s32.totalorder %s221, %s223
      %p230 = scmp.eq.s32.totalorder %s22, 7
      %p231 = por %p229, %p230
      %p232 = scmp.ne.s32.totalorder %s223, %s224
      %p233 = scmp.eq.s32.totalorder %s22, 0
      %p234 = por %p232, %p233
      %p235 = scmp.ne.s32.totalorder %s223, %s224
      %p236 = scmp.eq.s32.totalorder %s23, 7
      %p237 = por %p235, %p236
      %p239 = scmp.ne.s32.totalorder %s224, %s238
      %p240 = scmp.eq.s32.totalorder %s23, 0
      %p241 = por %p239, %p240
      %s243 = sadd.s32 %s242, 1
      %p246 = scmp.eq.s32.totalorder %s17, 7
      %p247 = scmp.ne.s32.totalorder %s242, %s244
      %p248 = scmp.eq.s32.totalorder %s17, 0
      %p249 = por %p247, %p248
      %p250 = scmp.ne.s32.totalorder %s242, %s244
      %p251 = scmp.eq.s32.totalorder %s22, 7
      %p252 = por %p250, %p251
      %p253 = scmp.ne.s32.totalorder %s244, %s245
      %p254 = scmp.eq.s32.totalorder %s22, 0
      %p255 = por %p253, %p254
      %p256 = scmp.ne.s32.totalorder %s244, %s245
      %p257 = scmp.eq.s32.totalorder %s23, 7
      %p258 = por %p256, %p257
      %p260 = scmp.ne.s32.totalorder %s245, %s259
      %p261 = scmp.eq.s32.totalorder %s23, 0
      %p262 = por %p260, %p261
      %s264 = sadd.s32 %s263, 1
      %p267 = scmp.eq.s32.totalorder %s17, 7
      %p268 = scmp.ne.s32.totalorder %s263, %s265
      %p269 = scmp.eq.s32.totalorder %s17, 0
      %p270 = por %p268, %p269
      %p271 = scmp.ne.s32.totalorder %s263, %s265
      %p272 = scmp.eq.s32.totalorder %s22, 7
      %p273 = por %p271, %p272
      %p274 = scmp.ne.s32.totalorder %s265, %s266
      %p275 = scmp.eq.s32.totalorder %s22, 0
      %p276 = por %p274, %p275
      %p277 = scmp.ne.s32.totalorder %s265, %s266
      %p278 = scmp.eq.s32.totalorder %s23, 7
      %p279 = por %p277, %p278
      %p281 = scmp.ne.s32.totalorder %s266, %s280
      %p282 = scmp.eq.s32.totalorder %s23, 0
      %p283 = por %p281, %p282
      %s284 = ssub.s32 %s24, %s36
      %p285 = scmp.eq.s32.totalorder %s284, 0
      %s287 = sadd.s32 %s286, 1
      %s288 = scalar_select %p285, %s286, %s287
      %p291 = pneg %p285
      %p292 = scmp.eq.s32.totalorder %s17, 7
      %p293 = por %p291, %p292
      %p294 = scmp.ne.s32.totalorder %s286, %s289
      %p295 = scmp.eq.s32.totalorder %s17, 0
      %p296 = por %p294, %p295
      %p297 = scmp.ne.s32.totalorder %s286, %s289
      %p298 = scmp.eq.s32.totalorder %s22, 7
      %p299 = por %p297, %p298
      %p300 = scmp.ne.s32.totalorder %s289, %s290
      %p301 = scmp.eq.s32.totalorder %s22, 0
      %p302 = por %p300, %p301
      %p303 = scmp.ne.s32.totalorder %s289, %s290
      %p304 = scmp.eq.s32.totalorder %s23, 7
      %p305 = por %p303, %p304
      %p307 = scmp.ne.s32.totalorder %s290, %s306
      %p308 = scmp.eq.s32.totalorder %s23, 0
      %p309 = por %p307, %p308
      %p310 = scmp.le.s32.totalorder 1, %s17
      %p311 = scmp.lt.s32.totalorder %s17, 9
      %p312 = pnand %p310, %p311
      %p313 = pneg %p312
      // Predicated region
      $region9: #{dit_block_forward.5} parent=5 // pred_check
        _
      $region10: #{dit_block_forward.5} parent=5 // pred_check_branch
        %315 = sbr.rel (%p312) target = $region12
      $region11: #{dit_block_forward.5} parent=5 // pred_region
        %s316 = ssub.s32 %s17, 1
        // Predicated region
        $region13: #{dit_block_forward.5} parent=11 // pred_check
          %p317 = pneg %p55
        $region14: #{dit_block_forward.5} parent=11 // pred_check_branch
          %319 = sbr.rel (%p317) target = $region16
        $region15: #{dit_block_forward.5} parent=11 // pred_region
          %s320 = smul.u32 2, %s26
          %p321 = scmp.lt.s32.totalorder %s320, 1
          %s322 = scalar_select %p321, %s320, 1
          %s323 = smul.addr %s322, 4
          %s324 = scalar_lea.vmem %s0, %s323
          %s325 = smul.u32 2, %s26
        $region16: #{dit_block_forward.5} parent=11 // pred_fallthru
          _
        // Predicated region
        $region17: #{dit_block_forward.5} parent=11 // pred_check
          %p326 = pneg %p81
        $region18: #{dit_block_forward.5} parent=11 // pred_check_branch
          %328 = sbr.rel (%p326) target = $region20
        $region19: #{dit_block_forward.5} parent=11 // pred_region
          %s329 = smul.u32 2, %s26
          %p330 = scmp.lt.s32.totalorder %s329, 1
          %s331 = scalar_select %p330, %s329, 1
          %s332 = smul.addr %s331, 8
          %s333 = scalar_lea.vmem %s1, %s332
          %s334 = smul.u32 2, %s26
        $region20: #{dit_block_forward.5} parent=11 // pred_fallthru
          _
        // Predicated region
        $region21: #{dit_block_forward.5} parent=11 // pred_check
          %p335 = pneg %p135
        $region22: #{dit_block_forward.5} parent=11 // pred_check_branch
          %337 = sbr.rel (%p335) target = $region24
        $region23: #{dit_block_forward.5} parent=11 // pred_region
          %s338 = smul.u32 2, %s26
          %p339 = scmp.lt.s32.totalorder %s338, 1
          %s340 = scalar_select %p339, %s338, 1
          %s341 = smul.addr %s340, 8
          %s342 = scalar_lea.vmem %s3, %s341
          %s343 = smul.u32 2, %s26
        $region24: #{dit_block_forward.5} parent=11 // pred_fallthru
          _
        // Predicated region
        $region25: #{dit_block_forward.5} parent=11 // pred_check
          %p344 = pneg %p234
        $region26: #{dit_block_forward.5} parent=11 // pred_check_branch
          %346 = sbr.rel (%p344) target = $region28
        $region27: #{dit_block_forward.5} parent=11 // pred_region
          _
        $region28: #{dit_block_forward.5} parent=11 // pred_fallthru
          _
        // Predicated region
        $region29: #{dit_block_forward.5} parent=11 // pred_check
          %p347 = pneg %p255
        $region30: #{dit_block_forward.5} parent=11 // pred_check_branch
          %349 = sbr.rel (%p347) target = $region32
        $region31: #{dit_block_forward.5} parent=11 // pred_region
          _
        $region32: #{dit_block_forward.5} parent=11 // pred_fallthru
          _
        // Predicated region
        $region33: #{dit_block_forward.5} parent=11 // pred_check
          %p350 = pneg %p276
        $region34: #{dit_block_forward.5} parent=11 // pred_check_branch
          %352 = sbr.rel (%p350) target = $region36
        $region35: #{dit_block_forward.5} parent=11 // pred_region
          _
        $region36: #{dit_block_forward.5} parent=11 // pred_fallthru
          _
      $region12: #{dit_block_forward.5} parent=5 // pred_fallthru
        _
      %p353 = scmp.lt.s32.totalorder %s17, 8
      // Predicated region
      $region37: #{dit_block_forward.5} parent=5 // pred_check
        %p354 = pneg %p353
      $region38: #{dit_block_forward.5} parent=5 // pred_check_branch
        %356 = sbr.rel (%p354) target = $region40
      $region39: #{dit_block_forward.5} parent=5 // pred_region
        // Predicated region
        $region41: #{dit_block_forward.5} parent=39 // pred_check
          %p357 = pneg %p103
        $region42: #{dit_block_forward.5} parent=39 // pred_check_branch
          %359 = sbr.rel (%p357) target = $region44
        $region43: #{dit_block_forward.5} parent=39 // pred_region
          %s360 = smul.u32 2, %s24
          %p361 = scmp.lt.s32.totalorder %s25, 7
          %s362 = scalar_select %p361, %s25, 7
          %p363 = scmp.lt.s32.totalorder %s360, 1
          %s364 = scalar_select %p363, %s360, 1
          %s365 = smul.addr %s362, 2
          %s366 = sadd.s32 %s364, %s365
          %s367 = smul.addr %s366, 8
          %s368 = scalar_lea.vmem %s2, %s367
          %s369 = smul.u32 2, %s24
        $region44: #{dit_block_forward.5} parent=39 // pred_fallthru
          _
        // Predicated region
        $region45: #{dit_block_forward.5} parent=39 // pred_check
          %p370 = pneg %p155
        $region46: #{dit_block_forward.5} parent=39 // pred_check_branch
          %372 = sbr.rel (%p370) target = $region48
        $region47: #{dit_block_forward.5} parent=39 // pred_region
          %p373 = scmp.lt.s32.totalorder %s25, 7
          %s374 = scalar_select %p373, %s25, 7
          %s375 = smul.addr %s374, 4
          %s376 = smul.addr %s375, 4
          %s377 = scalar_lea.vmem %s4, %s376
        $region48: #{dit_block_forward.5} parent=39 // pred_fallthru
          _
        // Predicated region
        $region49: #{dit_block_forward.5} parent=39 // pred_check
          %p378 = pneg %p181
        $region50: #{dit_block_forward.5} parent=39 // pred_check_branch
          %380 = sbr.rel (%p378) target = $region52
        $region51: #{dit_block_forward.5} parent=39 // pred_region
          %p381 = scmp.lt.s32.totalorder %s25, 7
          %s382 = scalar_select %p381, %s25, 7
          %s383 = smul.addr %s382, 4
          %s384 = smul.addr %s383, 4
          %s385 = scalar_lea.vmem %s5, %s384
        $region52: #{dit_block_forward.5} parent=39 // pred_fallthru
          _
        // Predicated region
        $region53: #{dit_block_forward.5} parent=39 // pred_check
          %p386 = pneg %p207
        $region54: #{dit_block_forward.5} parent=39 // pred_check_branch
          %388 = sbr.rel (%p386) target = $region56
        $region55: #{dit_block_forward.5} parent=39 // pred_region
          %p389 = scmp.lt.s32.totalorder %s25, 7
          %s390 = scalar_select %p389, %s25, 7
          %s391 = smul.addr %s390, 16
          %s392 = smul.addr %s391, 4
          %s393 = scalar_lea.vmem %s6, %s392
        $region56: #{dit_block_forward.5} parent=39 // pred_fallthru
          _
      $region40: #{dit_block_forward.5} parent=5 // pred_fallthru
        _
      %p394 = scmp.le.s32.totalorder 1, %s17
      %p395 = scmp.lt.s32.totalorder %s17, 9
      %p396 = pnand %p394, %p395
      %p397 = pneg %p396
      // Predicated region
      $region57: #{dit_block_forward.5} parent=5 // pred_check
        _
      $region58: #{dit_block_forward.5} parent=5 // pred_check_branch
        %399 = sbr.rel (%p396) target = $region60
      $region59: #{dit_block_forward.5} parent=5 // pred_region
        %s400 = ssub.s32 %s17, 1
        %s401 = smul.u32 2, %s26
        %p402 = scmp.lt.s32.totalorder %s401, 1
        %s403 = scalar_select %p402, %s401, 1
        %s404 = smul.addr %s403, 4
        %s405 = scalar_lea.vmem %s0, %s404
        %p406 = pneg %p55
        %p407 = pneg %p52
        %s408 = smul.u32 2, %s26
        %p409 = scmp.lt.s32.totalorder %s408, 1
        %s410 = scalar_select %p409, %s408, 1
        %s411 = smul.addr %s410, 8
        %s412 = scalar_lea.vmem %s1, %s411
        %p413 = pneg %p81
        %p414 = pneg %p78
        %s415 = smul.u32 2, %s26
        %p416 = scmp.lt.s32.totalorder %s27, 7
        %s417 = scalar_select %p416, %s27, 7
        %p418 = scmp.lt.s32.totalorder %s415, 1
        %s419 = scalar_select %p418, %s415, 1
        %s420 = smul.addr %s417, 2
        %s421 = sadd.s32 %s419, %s420
        %s422 = smul.addr %s421, 8
        %s423 = scalar_lea.vmem %s2, %s422
        %p424 = pneg %p109
        %p425 = pneg %p106
        %s426 = smul.u32 2, %s26
        %p427 = scmp.lt.s32.totalorder %s426, 1
        %s428 = scalar_select %p427, %s426, 1
        %s429 = smul.addr %s428, 8
        %s430 = scalar_lea.vmem %s3, %s429
        %p431 = pneg %p135
        %p432 = pneg %p132
        %p433 = scmp.lt.s32.totalorder %s27, 7
        %s434 = scalar_select %p433, %s27, 7
        %s435 = smul.addr %s434, 4
        %s436 = smul.addr %s435, 4
        %s437 = scalar_lea.vmem %s4, %s436
        %p438 = pneg %p161
        %p439 = pneg %p158
        %p440 = scmp.lt.s32.totalorder %s27, 7
        %s441 = scalar_select %p440, %s27, 7
        %s442 = smul.addr %s441, 4
        %s443 = smul.addr %s442, 4
        %s444 = scalar_lea.vmem %s5, %s443
        %p445 = pneg %p187
        %p446 = pneg %p184
        %p447 = scmp.lt.s32.totalorder %s27, 7
        %s448 = scalar_select %p447, %s27, 7
        %s449 = smul.addr %s448, 16
        %s450 = smul.addr %s449, 4
        %s451 = scalar_lea.vmem %s6, %s450
        %p452 = pneg %p213
        %p453 = pneg %p210
        %p454 = pneg %p234
        %p455 = pneg %p231
        %p456 = pneg %p255
        %p457 = pneg %p252
        %p458 = pneg %p276
        %p459 = pneg %p273
        %p460 = pneg %p302
        %p461 = pneg %p299
        %s462 = smul.u32 2, %s26
        %p463 = scmp.lt.s32.totalorder %s462, 1
        %s464 = scalar_select %p463, %s462, 1
        %s465 = smul.addr %s464, 4
        %s466 = scalar_lea.vmem %s0, %s465
        %s467 = smul.u32 2, %s26
        %s468 = smul.u32 2, %s26
        %p469 = scmp.lt.s32.totalorder %s468, 1
        %s470 = scalar_select %p469, %s468, 1
        %s471 = smul.addr %s470, 8
        %s472 = scalar_lea.vmem %s1, %s471
        %s473 = smul.u32 2, %s26
        %s474 = smul.u32 2, %s26
        %p475 = scmp.lt.s32.totalorder %s27, 7
        %s476 = scalar_select %p475, %s27, 7
        %p477 = scmp.lt.s32.totalorder %s474, 1
        %s478 = scalar_select %p477, %s474, 1
        %s479 = smul.addr %s476, 2
        %s480 = sadd.s32 %s478, %s479
        %s481 = smul.addr %s480, 8
        %s482 = scalar_lea.vmem %s2, %s481
        %s483 = smul.u32 2, %s26
        %s484 = smul.u32 2, %s26
        %p485 = scmp.lt.s32.totalorder %s484, 1
        %s486 = scalar_select %p485, %s484, 1
        %s487 = smul.addr %s486, 8
        %s488 = scalar_lea.vmem %s3, %s487
        %s489 = smul.u32 2, %s26
        %p490 = scmp.lt.s32.totalorder %s27, 7
        %s491 = scalar_select %p490, %s27, 7
        %s492 = smul.addr %s491, 4
        %s493 = smul.addr %s492, 4
        %s494 = scalar_lea.vmem %s4, %s493
        %p495 = scmp.lt.s32.totalorder %s27, 7
        %s496 = scalar_select %p495, %s27, 7
        %s497 = smul.addr %s496, 4
        %s498 = smul.addr %s497, 4
        %s499 = scalar_lea.vmem %s5, %s498
        %p500 = scmp.lt.s32.totalorder %s27, 7
        %s501 = scalar_select %p500, %s27, 7
        %s502 = smul.addr %s501, 16
        %s503 = smul.addr %s502, 4
        %s504 = scalar_lea.vmem %s6, %s503
        %s505 = smul.u32 2, %s26
        %p507 = scmp.eq.s32.totalorder %s27, 0
        // Predicated region
        $region61: #{dit_block_forward.5} parent=59 // pred_check
          %p508 = pneg %p507
        $region62: #{dit_block_forward.5} parent=59 // pred_check_branch
          %510 = sbr.rel (%p508) target = $region64
        $region63: #{dit_block_forward.5} parent=59 // pred_region
          %vm511 = vcmask 261120
          %512 = vst.msk [vmem:[#allocation2] sm:$0xff] %vm511, 0.0
          %513 = vst.msk [vmem:[#allocation2 + $0x8] sm:$0xff] %vm511, 0.0
        $region64: #{dit_block_forward.5} parent=59 // pred_fallthru
          _
        %v514 = vld [vmem:[%s466] sm:$0xf]
        %v515 = vld [vmem:[%s466 + $0x4] sm:$0xf]
        %v516 = vld [vmem:[%s494] sm:$0xf]
        %v517 = vld [vmem:[%s494 + $0x4] sm:$0xf]
        %v518 = vld [vmem:[%s494 + $0x8] sm:$0xf]
        %v519 = vld [vmem:[%s494 + $0xc] sm:$0xf]
        %v522 = vunpack.c.l.b16 %v514
        %v523 = vunpack.c.l.b16 %v515
        %v524 = vpack.c.b16 %v523, %v522
        %v529 = vunpack.c.l.b16 %v516
        %v530 = vunpack.c.l.b16 %v517
        %v531 = vunpack.c.l.b16 %v518
        %v532 = vunpack.c.l.b16 %v519
        %v533 = vpack.c.b16 %v530, %v529
        %v534 = vpack.c.b16 %v532, %v531
        %vm537 = vcmask 261120
        %v539 = vsel %vm537, %v524, 0
        %541 = vmatpush.bf16.msra.mxu0 0
        %542 = vmatpush.bf16.msra.mxu0 0
        %543 = vmatpush.bf16.msra.mxu0 0
        %544 = vmatpush.bf16.msra.mxu0 0
        %545 = vmatpush.bf16.msra.mxu0 0
        %546 = vmatpush.bf16.msra.mxu0 0
        %547 = vmatpush.bf16.msra.mxu0 %v534
        %548 = vmatpush.bf16.msra.mxu0 %v533
        %549 = vmatmul.bf16.gmra.mxu0 %v539
        %v550 = vpop.f32.mrf.mxu0
        %v551 = vadd.f32 0.0, %v550
        %v552 = vpop.f32.mrf.mxu0
        %v553 = vadd.f32 0.0, %v552
        %554 = vdwg.mxu0
        %v555 = vld [vmem:[%s499] sm:$0xf]
        %v556 = vld [vmem:[%s499 + $0x4] sm:$0xf]
        %v557 = vld [vmem:[%s499 + $0x8] sm:$0xf]
        %v558 = vld [vmem:[%s499 + $0xc] sm:$0xf]
        %v563 = vunpack.c.l.b16 %v555
        %v564 = vunpack.c.l.b16 %v556
        %v565 = vunpack.c.l.b16 %v557
        %v566 = vunpack.c.l.b16 %v558
        %v567 = vpack.c.b16 %v564, %v563
        %v568 = vpack.c.b16 %v566, %v565
        %571 = vmatpush.bf16.msra.mxu0 0
        %572 = vmatpush.bf16.msra.mxu0 0
        %573 = vmatpush.bf16.msra.mxu0 0
        %574 = vmatpush.bf16.msra.mxu0 0
        %575 = vmatpush.bf16.msra.mxu0 0
        %576 = vmatpush.bf16.msra.mxu0 0
        %577 = vmatpush.bf16.msra.mxu0 %v568
        %578 = vmatpush.bf16.msra.mxu0 %v567
        %579 = vmatmul.bf16.gmra.mxu0 %v539
        %v580 = vpop.f32.mrf.mxu0
        %v581 = vadd.f32 0.0, %v580
        %v582 = vpop.f32.mrf.mxu0
        %v583 = vadd.f32 0.0, %v582
        %584 = vdwg.mxu0
        %v585 = vmul.f32 %v551, 0.5
        %v586 = vmul.f32 %v553, 0.5
        %v587 = vmul.f32 %v551, 0.70710677
        %v588 = vmul.f32 %v553, 0.70710677
        %vm589 = vcmp.ge.f32.partialorder %v587, 0.0
        %vm590 = vcmp.ge.f32.partialorder %v588, 0.0
        %v591 = vsel %vm589, 1.0, -1.0
        %v592 = vsel %vm590, 1.0, -1.0
        %v593 = vand.u32 2147483647, %v587
        %v594 = vand.u32 2147483647, %v588
        %v595 = vmul.f32 %v593, 0.3275911
        %v596 = vmul.f32 %v594, 0.3275911
        %v597 = vadd.f32 %v595, 1.0
        %v598 = vadd.f32 %v596, 1.0
        %v599 = vrcp.pop %v597
        %v600 = vmul.f32 %v597, %v599
        %v601 = vsub.f32 1.0, %v600
        %v602 = vmul.f32 %v599, %v601
        %v603 = vadd.f32 %v599, %v602
        %vm604 = vweird.f32 %v597
        %vm605 = vweird.f32 %v599
        %vm606 = vmor %vm604, %vm605
        %v607 = vsel %vm606, %v599, %v603
        %v608 = vand.u32 2147483647, %v597
        %vm609 = vcmp.eq.f32.partialorder %v608, 8.507059e+37
        %v610 = vand.u32 %v597, 2147483648
        %v611 = vor.u32 1.1754944e-38, %v610
        %v612 = vsel %vm609, %v611, %v607
        %v613 = vmul.f32 1.0, %v612
        %v614 = vrcp.pop %v598
        %v615 = vmul.f32 %v598, %v614
        %v616 = vsub.f32 1.0, %v615
        %v617 = vmul.f32 %v614, %v616
        %v618 = vadd.f32 %v614, %v617
        %vm619 = vweird.f32 %v598
        %vm620 = vweird.f32 %v614
        %vm621 = vmor %vm619, %vm620
        %v622 = vsel %vm621, %v614, %v618
        %v623 = vand.u32 2147483647, %v598
        %vm624 = vcmp.eq.f32.partialorder %v623, 8.507059e+37
        %v625 = vand.u32 %v598, 2147483648
        %v626 = vor.u32 1.1754944e-38, %v625
        %v627 = vsel %vm624, %v626, %v622
        %v628 = vmul.f32 1.0, %v627
        %v629 = vmul.f32 %v613, 1.0614054
        %v630 = vmul.f32 %v628, 1.0614054
        %v631 = vadd.f32 %v629, -1.4531521
        %v632 = vadd.f32 %v630, -1.4531521
        %v633 = vmul.f32 %v613, %v631
        %v634 = vmul.f32 %v628, %v632
        %v635 = vadd.f32 %v633, 1.4214138
        %v636 = vadd.f32 %v634, 1.4214138
        %v637 = vmul.f32 %v613, %v635
        %v638 = vmul.f32 %v628, %v636
        %v639 = vadd.f32 %v637, -0.28449672
        %v640 = vadd.f32 %v638, -0.28449672
        %v641 = vmul.f32 %v613, %v639
        %v642 = vmul.f32 %v628, %v640
        %v643 = vadd.f32 %v641, 0.2548296
        %v644 = vadd.f32 %v642, 0.2548296
        %v645 = vmul.f32 %v613, %v643
        %v646 = vmul.f32 %v628, %v644
        %v647 = vsub.f32 0.0, %v593
        %v648 = vsub.f32 0.0, %v594
        %v649 = vmul.f32 %v647, %v593
        %v650 = vmul.f32 %v648, %v594
        %v651 = vmul.f32 %v649, 1.442695
        %v652 = vpow.pop %v651
        %v653 = vmul.f32 %v650, 1.442695
        %v654 = vpow.pop %v653
        %v655 = vmul.f32 %v645, %v652
        %v656 = vmul.f32 %v646, %v654
        %v657 = vsub.f32 1.0, %v655
        %v658 = vsub.f32 1.0, %v656
        %v659 = vmul.f32 %v591, %v657
        %v660 = vmul.f32 %v592, %v658
        %v661 = vadd.f32 %v659, 1.0
        %v662 = vadd.f32 %v660, 1.0
        %v663 = vmul.f32 %v585, %v661
        %v664 = vmul.f32 %v586, %v662
        %v665 = vmul.f32 %v663, %v581
        %v666 = vmul.f32 %v664, %v583
        %v667 = vpack.c.bf16 %v666, %v665
        %v668 = vld [vmem:[%s504] sm:$0xf]
        %v669 = vld [vmem:[%s504 + $0x4] sm:$0xf]
        %v670 = vld [vmem:[%s504 + $0x8] sm:$0xf]
        %v671 = vld [vmem:[%s504 + $0xc] sm:$0xf]
        %v672 = vld [vmem:[%s504 + $0x10] sm:$0xf]
        %v673 = vld [vmem:[%s504 + $0x14] sm:$0xf]
        %v674 = vld [vmem:[%s504 + $0x18] sm:$0xf]
        %v675 = vld [vmem:[%s504 + $0x1c] sm:$0xf]
        %v676 = vld [vmem:[%s504 + $0x20] sm:$0xf]
        %v677 = vld [vmem:[%s504 + $0x24] sm:$0xf]
        %v678 = vld [vmem:[%s504 + $0x28] sm:$0xf]
        %v679 = vld [vmem:[%s504 + $0x2c] sm:$0xf]
        %v680 = vld [vmem:[%s504 + $0x30] sm:$0xf]
        %v681 = vld [vmem:[%s504 + $0x34] sm:$0xf]
        %v682 = vld [vmem:[%s504 + $0x38] sm:$0xf]
        %v683 = vld [vmem:[%s504 + $0x3c] sm:$0xf]
        %v700 = vunpack.c.l.b16 %v668
        %v701 = vunpack.c.l.b16 %v669
        %v702 = vunpack.c.l.b16 %v670
        %v703 = vunpack.c.l.b16 %v671
        %v704 = vunpack.c.l.b16 %v672
        %v705 = vunpack.c.l.b16 %v673
        %v706 = vunpack.c.l.b16 %v674
        %v707 = vunpack.c.l.b16 %v675
        %v708 = vunpack.c.l.b16 %v676
        %v709 = vunpack.c.l.b16 %v677
        %v710 = vunpack.c.l.b16 %v678
        %v711 = vunpack.c.l.b16 %v679
        %v712 = vunpack.c.l.b16 %v680
        %v713 = vunpack.c.l.b16 %v681
        %v714 = vunpack.c.l.b16 %v682
        %v715 = vunpack.c.l.b16 %v683
        %v716 = vpack.c.b16 %v701, %v700
        %v717 = vpack.c.b16 %v703, %v702
        %v718 = vpack.c.b16 %v705, %v704
        %v719 = vpack.c.b16 %v707, %v706
        %v720 = vpack.c.b16 %v709, %v708
        %v721 = vpack.c.b16 %v711, %v710
        %v722 = vpack.c.b16 %v713, %v712
        %v723 = vpack.c.b16 %v715, %v714
        %732 = vmatpush.bf16.msra.mxu0 %v723
        %733 = vmatpush.bf16.msra.mxu0 %v722
        %734 = vmatpush.bf16.msra.mxu0 %v721
        %735 = vmatpush.bf16.msra.mxu0 %v720
        %736 = vmatpush.bf16.msra.mxu0 %v719
        %737 = vmatpush.bf16.msra.mxu0 %v718
        %738 = vmatpush.bf16.msra.mxu0 %v717
        %739 = vmatpush.bf16.msra.mxu0 %v716
        %740 = vmatmul.bf16.gmra.mxu0 %v667
        %v741 = vpop.f32.mrf.mxu0
        %v742 = vadd.f32 0.0, %v741
        %v743 = vpop.f32.mrf.mxu0
        %v744 = vadd.f32 0.0, %v743
        %745 = vdwg.mxu0
        %v746 = vld [vmem:[#allocation2] sm:$0xff]
        %v747 = vld [vmem:[#allocation2 + $0x8] sm:$0xff]
        %v748 = vld [vmem:[%s482] sm:$0xff]
        %v749 = vld [vmem:[%s482 + $0x8] sm:$0xff]
        %751 = vset.pattern.permute.xlu0 0
        %752 = vperm.xlu0 %751, %v748
        %v753 = vpop.permute.xlu0 %752
        %756 = vset.pattern.permute.xlu0 0
        %757 = vperm.xlu0 %756, %v749
        %v758 = vpop.permute.xlu0 %757
        %v760 = vmul.f32 %v742, %v753
        %v761 = vmul.f32 %v744, %v758
        %v762 = vadd.f32 %v746, %v760
        %v763 = vadd.f32 %v747, %v761
        %764 = vst.msk [vmem:[#allocation2] sm:$0xff] %vm537, %v762
        %765 = vst.msk [vmem:[#allocation2 + $0x8] sm:$0xff] %vm537, %v763
        %p766 = scmp.eq.s32.totalorder %s27, 7
        // Predicated region
        $region65: #{dit_block_forward.5} parent=59 // pred_check
          %p767 = pneg %p766
        $region66: #{dit_block_forward.5} parent=59 // pred_check_branch
          %769 = sbr.rel (%p767) target = $region68
        $region67: #{dit_block_forward.5} parent=59 // pred_region
          %v770 = vld [vmem:[%s7] sm:$0xf]
          %v771 = vld [vmem:[%s7 + $0x4] sm:$0xf]
          %v772 = vld [vmem:[%s7 + $0x8] sm:$0xf]
          %v773 = vld [vmem:[%s7 + $0xc] sm:$0xf]
          %v778 = vunpack.c.l.b16 %v770
          %v779 = vunpack.c.l.b16 %v771
          %v780 = vunpack.c.l.b16 %v772
          %v781 = vunpack.c.l.b16 %v773
          %v782 = vpack.c.b16 %v779, %v778
          %v783 = vpack.c.b16 %v781, %v780
          %786 = vmatpush.bf16.msra.mxu0 0
          %787 = vmatpush.bf16.msra.mxu0 0
          %788 = vmatpush.bf16.msra.mxu0 0
          %789 = vmatpush.bf16.msra.mxu0 0
          %790 = vmatpush.bf16.msra.mxu0 0
          %791 = vmatpush.bf16.msra.mxu0 0
          %792 = vmatpush.bf16.msra.mxu0 %v783
          %793 = vmatpush.bf16.msra.mxu0 %v782
          %794 = vmatmul.bf16.gmra.mxu0 %v539
          %v795 = vpop.f32.mrf.mxu0
          %v796 = vadd.f32 0.0, %v795
          %v797 = vpop.f32.mrf.mxu0
          %v798 = vadd.f32 0.0, %v797
          %799 = vdwg.mxu0
          %v800 = vld [vmem:[%s8] sm:$0xf]
          %v801 = vld [vmem:[%s8 + $0x4] sm:$0xf]
          %v802 = vld [vmem:[%s8 + $0x8] sm:$0xf]
          %v803 = vld [vmem:[%s8 + $0xc] sm:$0xf]
          %v808 = vunpack.c.l.b16 %v800
          %v809 = vunpack.c.l.b16 %v801
          %v810 = vunpack.c.l.b16 %v802
          %v811 = vunpack.c.l.b16 %v803
          %v812 = vpack.c.b16 %v809, %v808
          %v813 = vpack.c.b16 %v811, %v810
          %816 = vmatpush.bf16.msra.mxu0 0
          %817 = vmatpush.bf16.msra.mxu0 0
          %818 = vmatpush.bf16.msra.mxu0 0
          %819 = vmatpush.bf16.msra.mxu0 0
          %820 = vmatpush.bf16.msra.mxu0 0
          %821 = vmatpush.bf16.msra.mxu0 0
          %822 = vmatpush.bf16.msra.mxu0 %v813
          %823 = vmatpush.bf16.msra.mxu0 %v812
          %824 = vmatmul.bf16.gmra.mxu0 %v539
          %v825 = vpop.f32.mrf.mxu0
          %v826 = vadd.f32 0.0, %v825
          %v827 = vpop.f32.mrf.mxu0
          %v828 = vadd.f32 0.0, %v827
          %829 = vdwg.mxu0
          %v830 = vmul.f32 %v796, 0.5
          %v831 = vmul.f32 %v798, 0.5
          %v832 = vmul.f32 %v796, 0.70710677
          %v833 = vmul.f32 %v798, 0.70710677
          %vm834 = vcmp.ge.f32.partialorder %v832, 0.0
          %vm835 = vcmp.ge.f32.partialorder %v833, 0.0
          %v836 = vsel %vm834, 1.0, -1.0
          %v837 = vsel %vm835, 1.0, -1.0
          %v838 = vand.u32 2147483647, %v832
          %v839 = vand.u32 2147483647, %v833
          %v840 = vmul.f32 %v838, 0.3275911
          %v841 = vmul.f32 %v839, 0.3275911
          %v842 = vadd.f32 %v840, 1.0
          %v843 = vadd.f32 %v841, 1.0
          %v844 = vrcp.pop %v842
          %v845 = vmul.f32 %v842, %v844
          %v846 = vsub.f32 1.0, %v845
          %v847 = vmul.f32 %v844, %v846
          %v848 = vadd.f32 %v844, %v847
          %vm849 = vweird.f32 %v842
          %vm850 = vweird.f32 %v844
          %vm851 = vmor %vm849, %vm850
          %v852 = vsel %vm851, %v844, %v848
          %v853 = vand.u32 2147483647, %v842
          %vm854 = vcmp.eq.f32.partialorder %v853, 8.507059e+37
          %v855 = vand.u32 %v842, 2147483648
          %v856 = vor.u32 1.1754944e-38, %v855
          %v857 = vsel %vm854, %v856, %v852
          %v858 = vmul.f32 1.0, %v857
          %v859 = vrcp.pop %v843
          %v860 = vmul.f32 %v843, %v859
          %v861 = vsub.f32 1.0, %v860
          %v862 = vmul.f32 %v859, %v861
          %v863 = vadd.f32 %v859, %v862
          %vm864 = vweird.f32 %v843
          %vm865 = vweird.f32 %v859
          %vm866 = vmor %vm864, %vm865
          %v867 = vsel %vm866, %v859, %v863
          %v868 = vand.u32 2147483647, %v843
          %vm869 = vcmp.eq.f32.partialorder %v868, 8.507059e+37
          %v870 = vand.u32 %v843, 2147483648
          %v871 = vor.u32 1.1754944e-38, %v870
          %v872 = vsel %vm869, %v871, %v867
          %v873 = vmul.f32 1.0, %v872
          %v874 = vmul.f32 %v858, 1.0614054
          %v875 = vmul.f32 %v873, 1.0614054
          %v876 = vadd.f32 %v874, -1.4531521
          %v877 = vadd.f32 %v875, -1.4531521
          %v878 = vmul.f32 %v858, %v876
          %v879 = vmul.f32 %v873, %v877
          %v880 = vadd.f32 %v878, 1.4214138
          %v881 = vadd.f32 %v879, 1.4214138
          %v882 = vmul.f32 %v858, %v880
          %v883 = vmul.f32 %v873, %v881
          %v884 = vadd.f32 %v882, -0.28449672
          %v885 = vadd.f32 %v883, -0.28449672
          %v886 = vmul.f32 %v858, %v884
          %v887 = vmul.f32 %v873, %v885
          %v888 = vadd.f32 %v886, 0.2548296
          %v889 = vadd.f32 %v887, 0.2548296
          %v890 = vmul.f32 %v858, %v888
          %v891 = vmul.f32 %v873, %v889
          %v892 = vsub.f32 0.0, %v838
          %v893 = vsub.f32 0.0, %v839
          %v894 = vmul.f32 %v892, %v838
          %v895 = vmul.f32 %v893, %v839
          %v896 = vmul.f32 %v894, 1.442695
          %v897 = vpow.pop %v896
          %v898 = vmul.f32 %v895, 1.442695
          %v899 = vpow.pop %v898
          %v900 = vmul.f32 %v890, %v897
          %v901 = vmul.f32 %v891, %v899
          %v902 = vsub.f32 1.0, %v900
          %v903 = vsub.f32 1.0, %v901
          %v904 = vmul.f32 %v836, %v902
          %v905 = vmul.f32 %v837, %v903
          %v906 = vadd.f32 %v904, 1.0
          %v907 = vadd.f32 %v905, 1.0
          %v908 = vmul.f32 %v830, %v906
          %v909 = vmul.f32 %v831, %v907
          %v910 = vmul.f32 %v908, %v826
          %v911 = vmul.f32 %v909, %v828
          %v912 = vpack.c.bf16 %v911, %v910
          %v913 = vld [vmem:[%s9] sm:$0xf]
          %v914 = vld [vmem:[%s9 + $0x4] sm:$0xf]
          %v915 = vld [vmem:[%s9 + $0x8] sm:$0xf]
          %v916 = vld [vmem:[%s9 + $0xc] sm:$0xf]
          %v917 = vld [vmem:[%s9 + $0x10] sm:$0xf]
          %v918 = vld [vmem:[%s9 + $0x14] sm:$0xf]
          %v919 = vld [vmem:[%s9 + $0x18] sm:$0xf]
          %v920 = vld [vmem:[%s9 + $0x1c] sm:$0xf]
          %v929 = vunpack.c.l.b16 %v913
          %v930 = vunpack.c.l.b16 %v914
          %v931 = vunpack.c.l.b16 %v915
          %v932 = vunpack.c.l.b16 %v916
          %v933 = vunpack.c.l.b16 %v917
          %v934 = vunpack.c.l.b16 %v918
          %v935 = vunpack.c.l.b16 %v919
          %v936 = vunpack.c.l.b16 %v920
          %v937 = vpack.c.b16 %v930, %v929
          %v938 = vpack.c.b16 %v932, %v931
          %v939 = vpack.c.b16 %v934, %v933
          %v940 = vpack.c.b16 %v936, %v935
          %vm945 = vcmask 523264
          %v947 = vsel %vm945, %v912, 0
          %949 = vmatpush.bf16.msra.mxu0 0
          %950 = vmatpush.bf16.msra.mxu0 0
          %951 = vmatpush.bf16.msra.mxu0 0
          %952 = vmatpush.bf16.msra.mxu0 0
          %953 = vmatpush.bf16.msra.mxu0 %v940
          %954 = vmatpush.bf16.msra.mxu0 %v939
          %955 = vmatpush.bf16.msra.mxu0 %v938
          %956 = vmatpush.bf16.msra.mxu0 %v937
          %957 = vmatmul.bf16.gmra.mxu0 %v947
          %v958 = vpop.f32.mrf.mxu0
          %v959 = vadd.f32 0.0, %v958
          %v960 = vpop.f32.mrf.mxu0
          %v961 = vadd.f32 0.0, %v960
          %962 = vdwg.mxu0
          %v963 = vld [vmem:[%s472] sm:$0xff]
          %v964 = vld [vmem:[%s472 + $0x8] sm:$0xff]
          %v965 = vld [vmem:[%s488] sm:$0xff]
          %v966 = vld [vmem:[%s488 + $0x8] sm:$0xff]
          %v967 = vld [vmem:[#allocation2] sm:$0xff]
          %v968 = vld [vmem:[#allocation2 + $0x8] sm:$0xff]
          %v969 = vadd.f32 %v967, %v959
          %v970 = vadd.f32 %v968, %v961
          %v971 = vmul.f32 %v965, %v969
          %v972 = vmul.f32 %v966, %v970
          %v973 = vadd.f32 %v963, %v971
          %v974 = vadd.f32 %v964, %v972
          %975 = vst.msk [vmem:[#allocation2] sm:$0xff] %vm537, %v973
          %976 = vst.msk [vmem:[#allocation2 + $0x8] sm:$0xff] %vm537, %v974
        $region68: #{dit_block_forward.5} parent=59 // pred_fallthru
          _
        // Predicated region
        $region69: #{dit_block_forward.5} parent=59 // pred_check
          %p977 = pneg %p299
        $region70: #{dit_block_forward.5} parent=59 // pred_check_branch
          %979 = sbr.rel (%p977) target = $region72
        $region71: #{dit_block_forward.5} parent=59 // pred_region
          %s980 = smul.u32 2, %s26
          %982 = vsyncadd [#allocation3], 0
          %s983 = smul.addr %s980, 8
          %s984 = scalar_lea.hbm %s10, %s983
          %s985 = sshll.u32 [#allocation2], 4
          %s986 = int_to_ptr.vmem [resolvable:$true] %s985
          %s987 = sshll.u32 %s984, 4
          %s988 = int_to_ptr.hbm [resolvable:$true] %s987
          %993 = dma.vmem_to_hbm [thread:$0]  %s986, 256, %s988, [#allocation3], 128, 128, 8
        $region72: #{dit_block_forward.5} parent=59 // pred_fallthru
          _
        // Predicated region
        $region73: #{dit_block_forward.5} parent=59 // pred_check
          %p994 = pneg %p299
        $region74: #{dit_block_forward.5} parent=59 // pred_check_branch
          %996 = sbr.rel (%p994) target = $region76
        $region75: #{dit_block_forward.5} parent=59 // pred_region
          %998 = dma.done [#allocation3], 256
        $region76: #{dit_block_forward.5} parent=59 // pred_fallthru
          _
      $region60: #{dit_block_forward.5} parent=5 // pred_fallthru
        _
      %p999 = scmp.le.s32.totalorder 2, %s17
      // Predicated region
      $region77: #{dit_block_forward.5} parent=5 // pred_check
        %p1000 = pneg %p999
      $region78: #{dit_block_forward.5} parent=5 // pred_check_branch
        %1002 = sbr.rel (%p1000) target = $region80
      $region79: #{dit_block_forward.5} parent=5 // pred_region
        %s1003 = ssub.s32 %s17, 2
      $region80: #{dit_block_forward.5} parent=5 // pred_fallthru
        _
    $region6: #{dit_block_forward.5} parent=1 // loop_footer
      %s21 = sadd.s32 1, %s17
    $region7: #{dit_block_forward.5} parent=1 // loop_footer_branch
      %16 = sbr.rel target = $region3
    $region8: #{dit_block_forward.5} parent=1 // loop_exit
      _
    %1004 = vsyncpa [#allocation3], 1
    %s1005 = scalar_lea.sflag [#allocation3], 1
    %1006 = vsyncpa %s1005, 1

</llo_original>
